<compile_context>
chip_gen: v6e
topology: v6e:2x2x1
jax: 0.10.0
libtpu: 0.0.40
codegen_flags: <defaults>
</compile_context>

<pallas_src>
import functools

import jax
import jax.numpy as jnp
from jax import lax
from jax.experimental import pallas as pl
from jax.experimental.pallas import tpu as pltpu


def _cdiv(a, b):
    return -(-a // b)


def _vmem_limit_bytes():
    try:
        cap = pltpu.get_tpu_info().vmem_capacity_bytes
        return max(32 * 1024 * 1024, int(cap * 0.75))
    except Exception:
        return 48 * 1024 * 1024  # safe on every generation (incl. v7x 64 MiB)


# ------------------------------ Pallas kernel ---------------------------------

def _deconv_bn_lrelu_kernel(x_ref, w_ref, scale_ref, bias_ref, o_ref, *,
                            tr, mw, cin, win, r0, c0, slope):
    """One (batch, coarse-row-tile) grid step.

    x_ref:     (Hp, Wp, cin)      bf16  padded NHWC image of this batch element
    w_ref:     (win*win, cin, N)  bf16  sub-pixel deconv weights (un-scaled)
    scale_ref: (1, N)             f32   folded BN scale  gamma/sqrt(var+eps)
    bias_ref:  (1, N)             f32   folded deconv-bias + BN shift
    o_ref:     (tr, mw, N)        bf16  coarse-grid output, N = s*s*cout
    """
    rt = pl.program_id(1)
    row0 = r0 + rt * tr                     # first padded-input row of this band
    n = o_ref.shape[-1]

    # Fused win x win gather: win^2 shifted slices of the resident image,
    # each a (tr*mw, cin) x (cin, N) MXU matmul accumulated in f32.
    acc = None
    for wy in range(win):
        for wx in range(win):
            a = x_ref[pl.ds(row0 + wy, tr), c0 + wx:c0 + wx + mw, :]
            a = a.reshape(tr * mw, cin)
            c = jnp.dot(a, w_ref[wy * win + wx],
                        preferred_element_type=jnp.float32)
            acc = c if acc is None else acc + c

    acc = acc * scale_ref[...] + bias_ref[...]      # eval-BN scale + bias (f32)
    acc = jnp.maximum(acc, acc * slope)             # LeakyReLU(slope)
    o_ref[...] = acc.reshape(tr, mw, n).astype(o_ref.dtype)


# ------------------------------ BaseDeConv ------------------------------------

class BaseDeConvPallas:
    """ConvTranspose2d(cin, cout, k, stride, padding, output_padding)
       -> BatchNorm2d(eval) -> LeakyReLU(0.1), fused into one Pallas kernel."""

    def __init__(self, key, in_channels, out_channels, ksize,
                 stride=2, padding=1, output_padding=1):
        self.cin, self.cout = in_channels, out_channels
        self.k, self.s, self.p, self.op = ksize, stride, padding, output_padding
        self.eps = 1e-5

        k0, k1, k2, k3, k4, k5 = jax.random.split(key, 6)
        fan = in_channels * ksize * ksize
        # raw PyTorch-layout parameters (also used by the pure-JAX reference)
        self.w_deconv = jax.random.normal(
            k0, (in_channels, out_channels, ksize, ksize), jnp.float32) / jnp.sqrt(fan)
        self.b = 0.01 * jax.random.normal(k1, (out_channels,), jnp.float32)
        self.gamma = 1.0 + 0.1 * jax.random.normal(k2, (out_channels,), jnp.float32)
        self.beta = 0.01 * jax.random.normal(k3, (out_channels,), jnp.float32)
        self.mean = 0.05 * jax.random.normal(k4, (out_channels,), jnp.float32)
        self.var = 1.0 + 0.1 * jnp.abs(jax.random.normal(k5, (out_channels,), jnp.float32))

        self._build_packed()
        self._vmem_limit = _vmem_limit_bytes()

    # -- one-time weight packing: sub-pixel decomposition of the deconv --------

    def _phase_taps(self, r):
        ph = (r + self.p) % self.s
        q = (r + self.p) // self.s
        return q, list(enumerate(range(ph, self.k, self.s)))

    def _build_packed(self):
        s, cin, cout = self.s, self.cin, self.cout
        per_r = [self._phase_taps(r) for r in range(s)]
        offs = [q - t for (q, taps) in per_r for (t, _) in taps] or [0]
        d_min, d_max = min(offs), max(offs)
        win = d_max - d_min + 1

        # (window tap) -> (output phase) weight tensor; un-scaled (BN applied
        # post-matmul in f32 for precision).
        w_big = jnp.zeros((win, win, cin, s, s, cout), jnp.float32)
        for ry in range(s):
            qy, taps_y = per_r[ry]
            for rx in range(s):
                qx, taps_x = per_r[rx]
                for ty, ky in taps_y:
                    wy = qy - ty - d_min
                    for tx, kx in taps_x:
                        wx = qx - tx - d_min
                        w_big = w_big.at[wy, wx, :, ry, rx, :].set(
                            self.w_deconv[:, :, ky, kx])

        n_cols = s * s * cout
        self.w_pack = w_big.reshape(win * win, cin, n_cols).astype(jnp.bfloat16)
        bnscale = self.gamma / jnp.sqrt(self.var + self.eps)
        self.scale_row = jnp.tile(bnscale, (s * s,))[None, :].astype(jnp.float32)
        self.bias_row = jnp.tile((self.b - self.mean) * bnscale + self.beta,
                                 (s * s,))[None, :].astype(jnp.float32)
        self.d_min, self.d_max, self.win = d_min, d_max, win
        self.n_cols = n_cols

    # -- forward ----------------------------------------------------------------

    def __call__(self, x):
        """x: (N, Cin, H, W) float32 NCHW -> (N, Cout, H_out, W_out) float32."""
        nb, cin, h, w = x.shape
        s, k, p, op = self.s, self.k, self.p, self.op
        h_out = (h - 1) * s - 2 * p + k + op
        w_out = (w - 1) * s - 2 * p + k + op
        mh, mw = _cdiv(h_out, s), _cdiv(w_out, s)
        d_min, d_max, win = self.d_min, self.d_max, self.win
        cout, N = self.cout, self.n_cols

        # Coarse-row tile: ~256 M-rows per step; keep >= 2 total grid steps
        # when possible so both v7x TensorCores are used.
        tr = max(1, min(mh, max(1, 256 // max(mw, 1))))
        if nb * _cdiv(mh, tr) < 2 and mh > 1:
            tr = _cdiv(mh, 2)
        nrt = _cdiv(mh, tr)
        mh_pad = nrt * tr

        # NHWC bf16 + halo padding done once in XLA (single cheap pass).
        pad_t = max(0, -d_min)
        pad_l = max(0, -d_min)
        pad_b = max(0, mh_pad + d_max - h)
        pad_r = max(0, mw + d_max - w)
        xp = jnp.pad(jnp.transpose(x, (0, 2, 3, 1)).astype(jnp.bfloat16),
                     ((0, 0), (pad_t, pad_b), (pad_l, pad_r), (0, 0)))
        Hp, Wp = h + pad_t + pad_b, w + pad_l + pad_r
        r0, c0 = pad_t + d_min, pad_l + d_min

        cost = pl.CostEstimate(
            flops=2 * nb * mh_pad * mw * win * win * cin * N,
            transcendentals=0,
            bytes_accessed=(nb * Hp * Wp * cin * 2          # image, read once
                            + win * win * cin * N * 2       # resident weights
                            + 2 * N * 4                     # scale + bias
                            + nb * mh_pad * mw * N * 2))    # bf16 output

        out = pl.pallas_call(
            functools.partial(_deconv_bn_lrelu_kernel, tr=tr, mw=mw, cin=cin,
                              win=win, r0=r0, c0=c0, slope=0.1),
            out_shape=jax.ShapeDtypeStruct((nb, mh_pad, mw, N), jnp.bfloat16),
            grid=(nb, nrt),
            in_specs=[
                # full padded image per batch element; constant across rt so it
                # is fetched once and stays resident across the row tiles
                pl.BlockSpec((None, Hp, Wp, cin), lambda b, rt: (b, 0, 0, 0)),
                # weights / scale / bias: single block, DMA'd exactly once
                pl.BlockSpec((win * win, cin, N), lambda b, rt: (0, 0, 0)),
                pl.BlockSpec((1, N), lambda b, rt: (0, 0)),
                pl.BlockSpec((1, N), lambda b, rt: (0, 0)),
            ],
            out_specs=pl.BlockSpec((None, tr, mw, N), lambda b, rt: (b, rt, 0, 0)),
            compiler_params=pltpu.CompilerParams(
                dimension_semantics=("parallel", "parallel"),
                vmem_limit_bytes=self._vmem_limit),
            cost_estimate=cost,
        )(xp, self.w_pack, self.scale_row, self.bias_row)

        # Depth-to-space folded into the single (mandatory) transpose to NCHW.
        y = out[:, :mh] if mh_pad != mh else out
        y = y.reshape(nb, mh, mw, s, s, cout)                 # (.., ry, rx, c)
        y = jnp.transpose(y, (0, 5, 1, 3, 2, 4))              # (nb, c, mh, ry, mw, rx)
        y = y.reshape(nb, cout, s * mh, s * mw)
        y = y[:, :, :h_out, :w_out]
        return y.astype(jnp.float32)

    # -- pure-JAX f32 reference (for the correctness check) ---------------------

    def reference(self, x):
        """ConvTranspose2d via lhs-dilated conv, then eval BN, then LeakyReLU(0.1)."""
        w_hwio = jnp.transpose(self.w_deconv[:, :, ::-1, ::-1], (2, 3, 0, 1))
        lo = self.k - 1 - self.p
        x_nhwc = jnp.transpose(x, (0, 2, 3, 1))
        y = lax.conv_general_dilated(
            x_nhwc, w_hwio, window_strides=(1, 1),
            padding=((lo, lo + self.op), (lo, lo + self.op)),
            lhs_dilation=(self.s, self.s),
            dimension_numbers=("NHWC", "HWIO", "NHWC"))
        y = y + self.b
        scale = self.gamma / jnp.sqrt(self.var + self.eps)
        y = (y - self.mean) * scale + self.beta
        y = jnp.where(y >= 0.0, y, 0.1 * y)
        return jnp.transpose(y, (0, 3, 1, 2))


# --------------------------------- main ----------------------------------------

if __name__ == "__main__":
    key = jax.random.PRNGKey(0)
    k_param, k_x = jax.random.split(key)

    in_channels, out_channels, ksize = 64, 32, 3   # stride=2, padding=1, output_padding=1
    batch, height, width = 2, 16, 16

    model = BaseDeConvPallas(k_param, in_channels, out_channels, ksize)
    x = jax.random.normal(k_x, (batch, in_channels, height, width), jnp.float32)

    fwd = jax.jit(lambda inp: model(inp))
    y = fwd(x)
    jax.block_until_ready(y)
    assert y.shape == (batch, out_channels, 2 * height, 2 * width), y.shape

    # numerical check against the pure-JAX f32 reference (bf16 MXU tolerance)
    y_ref = jax.jit(lambda inp: model.reference(inp))(x)
    jax.block_until_ready(y_ref)
    err = float(jnp.max(jnp.abs(y - y_ref)))
    assert err < 1e-1, f"max abs err {err}"

    print("KERNEL_OK")
</pallas_src>

<mosaic_0001>
module attributes {stable_mosaic.version = 11 : i64} {
  func.func @_deconv_bn_lrelu_kernel(%arg0: i32, %arg1: i32, %arg2: memref<1x17x17x64xbf16, #tpu.memory_space<vmem>>, %arg3: memref<4x64x128xbf16, #tpu.memory_space<vmem>>, %arg4: memref<1x128xf32, #tpu.memory_space<vmem>>, %arg5: memref<1x128xf32, #tpu.memory_space<vmem>>, %arg6: memref<1x16x16x128xbf16, #tpu.memory_space<vmem>>) attributes {dimension_semantics = [#tpu.dimension_semantics<parallel>, #tpu.dimension_semantics<parallel>], iteration_bounds = array<i64: 2, 1>, scalar_prefetch = 0 : i64, scratch_operands = 0 : i64, tpu.core_type = #tpu.core_type<tc>, window_params = [{transform_indices = @transform_0, window_bounds = array<i64: 1, 17, 17, 64>}, {pipeline_mode = #tpu.pipeline_mode<synchronous>, transform_indices = @transform_1, window_bounds = array<i64: 4, 64, 128>}, {pipeline_mode = #tpu.pipeline_mode<synchronous>, transform_indices = @transform_2, window_bounds = array<i64: 1, 128>}, {pipeline_mode = #tpu.pipeline_mode<synchronous>, transform_indices = @transform_3, window_bounds = array<i64: 1, 128>}, {transform_indices = @transform_4, window_bounds = array<i64: 1, 16, 16, 128>}]} {
    %c16_i32 = arith.constant 16 : i32
    %0 = arith.muli %arg1, %c16_i32 : i32
    %c0_i32 = arith.constant 0 : i32
    %1 = arith.addi %c0_i32, %0 : i32
    %c0_i32_0 = arith.constant 0 : i32
    %2 = arith.addi %1, %c0_i32_0 : i32
    %c0 = arith.constant 0 : index
    %3 = arith.index_cast %2 : i32 to index
    %c0_1 = arith.constant 0 : index
    %c0_2 = arith.constant 0 : index
    %4 = vector.load %arg2[%c0, %3, %c0_1, %c0_2] : memref<1x17x17x64xbf16, #tpu.memory_space<vmem>>, vector<1x16x16x64xbf16>
    %5 = vector.shape_cast %4 : vector<1x16x16x64xbf16> to vector<16x16x64xbf16>
    %6 = vector.shape_cast %5 : vector<16x16x64xbf16> to vector<256x64xbf16>
    %c0_3 = arith.constant 0 : index
    %c0_4 = arith.constant 0 : index
    %c0_5 = arith.constant 0 : index
    %7 = vector.load %arg3[%c0_3, %c0_4, %c0_5] : memref<4x64x128xbf16, #tpu.memory_space<vmem>>, vector<1x64x128xbf16>
    %8 = vector.shape_cast %7 : vector<1x64x128xbf16> to vector<64x128xbf16>
    %cst = arith.constant dense<0.000000e+00> : vector<256x128xf32>
    %9 = tpu.matmul %6, %8, %cst {dimension_numbers = #tpu.dot_dimension_numbers<[1], [0], [0], [1], [0, 0, 1, 1], [], []>} : vector<256x64xbf16>, vector<64x128xbf16>, vector<256x128xf32> -> vector<256x128xf32>
    %c0_i32_6 = arith.constant 0 : i32
    %10 = arith.addi %1, %c0_i32_6 : i32
    %c0_7 = arith.constant 0 : index
    %11 = arith.index_cast %10 : i32 to index
    %c1 = arith.constant 1 : index
    %c0_8 = arith.constant 0 : index
    %12 = vector.load %arg2[%c0_7, %11, %c1, %c0_8] : memref<1x17x17x64xbf16, #tpu.memory_space<vmem>>, vector<1x16x16x64xbf16>
    %13 = vector.shape_cast %12 : vector<1x16x16x64xbf16> to vector<16x16x64xbf16>
    %14 = vector.shape_cast %13 : vector<16x16x64xbf16> to vector<256x64xbf16>
    %c1_9 = arith.constant 1 : index
    %c0_10 = arith.constant 0 : index
    %c0_11 = arith.constant 0 : index
    %15 = vector.load %arg3[%c1_9, %c0_10, %c0_11] : memref<4x64x128xbf16, #tpu.memory_space<vmem>>, vector<1x64x128xbf16>
    %16 = vector.shape_cast %15 : vector<1x64x128xbf16> to vector<64x128xbf16>
    %cst_12 = arith.constant dense<0.000000e+00> : vector<256x128xf32>
    %17 = tpu.matmul %14, %16, %cst_12 {dimension_numbers = #tpu.dot_dimension_numbers<[1], [0], [0], [1], [0, 0, 1, 1], [], []>} : vector<256x64xbf16>, vector<64x128xbf16>, vector<256x128xf32> -> vector<256x128xf32>
    %18 = arith.addf %9, %17 : vector<256x128xf32>
    %c1_i32 = arith.constant 1 : i32
    %19 = arith.addi %1, %c1_i32 : i32
    %c0_13 = arith.constant 0 : index
    %20 = arith.index_cast %19 : i32 to index
    %c0_14 = arith.constant 0 : index
    %c0_15 = arith.constant 0 : index
    %21 = vector.load %arg2[%c0_13, %20, %c0_14, %c0_15] : memref<1x17x17x64xbf16, #tpu.memory_space<vmem>>, vector<1x16x16x64xbf16>
    %22 = vector.shape_cast %21 : vector<1x16x16x64xbf16> to vector<16x16x64xbf16>
    %23 = vector.shape_cast %22 : vector<16x16x64xbf16> to vector<256x64xbf16>
    %c2 = arith.constant 2 : index
    %c0_16 = arith.constant 0 : index
    %c0_17 = arith.constant 0 : index
    %24 = vector.load %arg3[%c2, %c0_16, %c0_17] : memref<4x64x128xbf16, #tpu.memory_space<vmem>>, vector<1x64x128xbf16>
    %25 = vector.shape_cast %24 : vector<1x64x128xbf16> to vector<64x128xbf16>
    %cst_18 = arith.constant dense<0.000000e+00> : vector<256x128xf32>
    %26 = tpu.matmul %23, %25, %cst_18 {dimension_numbers = #tpu.dot_dimension_numbers<[1], [0], [0], [1], [0, 0, 1, 1], [], []>} : vector<256x64xbf16>, vector<64x128xbf16>, vector<256x128xf32> -> vector<256x128xf32>
    %27 = arith.addf %18, %26 : vector<256x128xf32>
    %c1_i32_19 = arith.constant 1 : i32
    %28 = arith.addi %1, %c1_i32_19 : i32
    %c0_20 = arith.constant 0 : index
    %29 = arith.index_cast %28 : i32 to index
    %c1_21 = arith.constant 1 : index
    %c0_22 = arith.constant 0 : index
    %30 = vector.load %arg2[%c0_20, %29, %c1_21, %c0_22] : memref<1x17x17x64xbf16, #tpu.memory_space<vmem>>, vector<1x16x16x64xbf16>
    %31 = vector.shape_cast %30 : vector<1x16x16x64xbf16> to vector<16x16x64xbf16>
    %32 = vector.shape_cast %31 : vector<16x16x64xbf16> to vector<256x64xbf16>
    %c3 = arith.constant 3 : index
    %c0_23 = arith.constant 0 : index
    %c0_24 = arith.constant 0 : index
    %33 = vector.load %arg3[%c3, %c0_23, %c0_24] : memref<4x64x128xbf16, #tpu.memory_space<vmem>>, vector<1x64x128xbf16>
    %34 = vector.shape_cast %33 : vector<1x64x128xbf16> to vector<64x128xbf16>
    %cst_25 = arith.constant dense<0.000000e+00> : vector<256x128xf32>
    %35 = tpu.matmul %32, %34, %cst_25 {dimension_numbers = #tpu.dot_dimension_numbers<[1], [0], [0], [1], [0, 0, 1, 1], [], []>} : vector<256x64xbf16>, vector<64x128xbf16>, vector<256x128xf32> -> vector<256x128xf32>
    %36 = arith.addf %27, %35 : vector<256x128xf32>
    %c0_26 = arith.constant 0 : index
    %c0_27 = arith.constant 0 : index
    %37 = vector.load %arg4[%c0_26, %c0_27] : memref<1x128xf32, #tpu.memory_space<vmem>>, vector<1x128xf32>
    %38 = vector.broadcast %37 : vector<1x128xf32> to vector<256x128xf32>
    %39 = arith.mulf %36, %38 : vector<256x128xf32>
    %c0_28 = arith.constant 0 : index
    %c0_29 = arith.constant 0 : index
    %40 = vector.load %arg5[%c0_28, %c0_29] : memref<1x128xf32, #tpu.memory_space<vmem>>, vector<1x128xf32>
    %41 = vector.broadcast %40 : vector<1x128xf32> to vector<256x128xf32>
    %42 = arith.addf %39, %41 : vector<256x128xf32>
    %cst_30 = arith.constant 1.000000e-01 : f32
    %43 = vector.broadcast %cst_30 : f32 to vector<256x128xf32>
    %44 = arith.mulf %42, %43 : vector<256x128xf32>
    %45 = arith.maximumf %42, %44 : vector<256x128xf32>
    %46 = vector.shape_cast %45 : vector<256x128xf32> to vector<16x16x128xf32>
    %47 = arith.truncf %46 : vector<16x16x128xf32> to vector<16x16x128xbf16>
    %c0_31 = arith.constant 0 : index
    %c0_32 = arith.constant 0 : index
    %c0_33 = arith.constant 0 : index
    %c0_34 = arith.constant 0 : index
    %48 = vector.load %arg6[%c0_31, %c0_32, %c0_33, %c0_34] : memref<1x16x16x128xbf16, #tpu.memory_space<vmem>>, vector<1x16x16x128xbf16>
    %49 = vector.shape_cast %48 : vector<1x16x16x128xbf16> to vector<16x16x128xbf16>
    %50 = vector.shape_cast %47 : vector<16x16x128xbf16> to vector<1x16x16x128xbf16>
    tpu.vector_store %arg6[%c0_31, %c0_32, %c0_33, %c0_34], %50 {strides = array<i32>} : memref<1x16x16x128xbf16, #tpu.memory_space<vmem>>, vector<1x16x16x128xbf16>,
    return
  }
  func.func @transform_0(%arg0: i32, %arg1: i32) -> (i32, i32, i32, i32) {
    %c0_i32 = arith.constant 0 : i32
    %c0_i32_0 = arith.constant 0 : i32
    %c0_i32_1 = arith.constant 0 : i32
    %c0_i32_2 = arith.constant 0 : i32
    return %arg0, %c0_i32, %c0_i32_0, %c0_i32_1 : i32, i32, i32, i32
  }
  func.func @transform_1(%arg0: i32, %arg1: i32) -> (i32, i32, i32) {
    %c0_i32 = arith.constant 0 : i32
    %c0_i32_0 = arith.constant 0 : i32
    %c0_i32_1 = arith.constant 0 : i32
    %c0_i32_2 = arith.constant 0 : i32
    return %c0_i32, %c0_i32_0, %c0_i32_1 : i32, i32, i32
  }
  func.func @transform_2(%arg0: i32, %arg1: i32) -> (i32, i32) {
    %c0_i32 = arith.constant 0 : i32
    %c0_i32_0 = arith.constant 0 : i32
    %c0_i32_1 = arith.constant 0 : i32
    return %c0_i32, %c0_i32_0 : i32, i32
  }
  func.func @transform_3(%arg0: i32, %arg1: i32) -> (i32, i32) {
    %c0_i32 = arith.constant 0 : i32
    %c0_i32_0 = arith.constant 0 : i32
    %c0_i32_1 = arith.constant 0 : i32
    return %c0_i32, %c0_i32_0 : i32, i32
  }
  func.func @transform_4(%arg0: i32, %arg1: i32) -> (i32, i32, i32, i32) {
    %c0_i32 = arith.constant 0 : i32
    %c0_i32_0 = arith.constant 0 : i32
    %c0_i32_1 = arith.constant 0 : i32
    return %arg0, %arg1, %c0_i32, %c0_i32_0 : i32, i32, i32, i32
  }
}

</mosaic_0001>

<llo_original>
// kernel: _lambda_.1
$region0: #{_lambda_.1}
  #allocation0 [shape = 'u32[]', space=smem, size = 0x4, offset = 0x4, fixed_abs, tag = 'smem constant byte address 0x4 - core index']
  #allocation1 [shape = 'u32[144,128]{1,0:T(1,128)}', space=vmem, size = 0x12000, scoped, tag = 'internal scratch']
  %s0 = inlined_call_operand.vmem [shape: bf16[2,17,17,64], index: 0, kind: input, shape index: {}]
  %s1 = inlined_call_operand.vmem [shape: bf16[4,64,128], index: 1, kind: input, shape index: {}]
  %s2 = inlined_call_operand.vmem [shape: f32[1,128], index: 2, kind: input, shape index: {}]
  %s3 = inlined_call_operand.vmem [shape: f32[1,128], index: 3, kind: input, shape index: {}]
  %s4 = inlined_call_operand.vmem [shape: bf16[2,16,16,128], index: 4, kind: output, shape index: {}]
  %s5 = sld [smem:[#allocation0]]
  $region49: #{_lambda_.1} parent=0
    _
  %s7 = ssub.s32 1, %s5
  %s8 = scalar_select 0, %s7, %s5
  loop: start=0, step=1, limit=4
  $region2: #{_lambda_.1} parent=0 // loop_pre_header
    _
  $region3: #{_lambda_.1} parent=0 // loop_header
    %s10 = sphi 0, %s14
    %p11 = scmp.ge.s32.totalorder %s10, 4
    %s17 = sphi 0, %s29
    %s18 = sphi 0, %s25
    %s19 = sphi 0, %s17
    %s20 = sphi 0, %s18
    %s21 = sphi 0, %s19
    %s22 = sphi 0, %s20
    %s32 = sphi 0, %s34
    %s35 = sphi 0, %s32
    %s36 = sphi 0, %s35
    %s52 = sphi 0, %s36
    %s56 = sphi 0, %s56
    %s58 = sphi 0, %s56
    %s59 = sphi 0, %s58
    %s73 = sphi 0, %s59
    %s77 = sphi 0, %s77
    %s79 = sphi 0, %s77
    %s80 = sphi 0, %s79
    %s94 = sphi 0, %s80
    %s98 = sphi 0, %s98
    %s100 = sphi 0, %s98
    %s101 = sphi 0, %s100
    %s115 = sphi 0, %s101
    %s123 = sphi 0, %s125
    %s126 = sphi 0, %s123
    %s127 = sphi 0, %s126
    %s143 = sphi 0, %s127
  $region4: #{_lambda_.1} parent=0 // loop_header_branch
    %13 = sbr.rel (%p11) target = $region8
  $region5: #{_lambda_.1} parent=0 // loop_body
    %s15 = ssub.s32 %s10, 1
    %s16 = ssub.s32 %s10, 2
    %s23 = sadd.s32 1, %s18
    %p24 = scmp.ge.s32.totalorder %s23, 1
    %s25 = scalar_select %p24, 0, %s23
    %s26 = sadd.s32 1, %s17
    %s27 = scalar_select %p24, %s26, %s17
    %p28 = scmp.ge.s32.totalorder %s27, 2
    %s29 = scalar_select %p28, 0, %s27
    %s30 = ssub.s32 %s17, %s29
    %p31 = scmp.eq.s32.totalorder %s30, 0
    %s33 = sadd.s32 %s32, 1
    %s34 = scalar_select %p31, %s32, %s33
    %p37 = pneg %p31
    %p38 = scmp.eq.s32.totalorder %s10, 1
    %p39 = por %p37, %p38
    %p40 = scmp.ne.s32.totalorder %s32, %s35
    %p41 = scmp.eq.s32.totalorder %s10, 0
    %p42 = por %p40, %p41
    %p43 = scmp.ne.s32.totalorder %s32, %s35
    %p44 = scmp.eq.s32.totalorder %s15, 1
    %p45 = por %p43, %p44
    %p46 = scmp.ne.s32.totalorder %s35, %s36
    %p47 = scmp.eq.s32.totalorder %s15, 0
    %p48 = por %p46, %p47
    %p49 = scmp.ne.s32.totalorder %s35, %s36
    %p50 = scmp.eq.s32.totalorder %s16, 1
    %p51 = por %p49, %p50
    %p53 = scmp.ne.s32.totalorder %s36, %s52
    %p54 = scmp.eq.s32.totalorder %s16, 0
    %p55 = por %p53, %p54
    %s57 = sadd.s32 %s56, 1
    %p60 = scmp.eq.s32.totalorder %s10, 1
    %p61 = scmp.ne.s32.totalorder %s56, %s58
    %p62 = scmp.eq.s32.totalorder %s10, 0
    %p63 = por %p61, %p62
    %p64 = scmp.ne.s32.totalorder %s56, %s58
    %p65 = scmp.eq.s32.totalorder %s15, 1
    %p66 = por %p64, %p65
    %p67 = scmp.ne.s32.totalorder %s58, %s59
    %p68 = scmp.eq.s32.totalorder %s15, 0
    %p69 = por %p67, %p68
    %p70 = scmp.ne.s32.totalorder %s58, %s59
    %p71 = scmp.eq.s32.totalorder %s16, 1
    %p72 = por %p70, %p71
    %p74 = scmp.ne.s32.totalorder %s59, %s73
    %p75 = scmp.eq.s32.totalorder %s16, 0
    %p76 = por %p74, %p75
    %s78 = sadd.s32 %s77, 1
    %p81 = scmp.eq.s32.totalorder %s10, 1
    %p82 = scmp.ne.s32.totalorder %s77, %s79
    %p83 = scmp.eq.s32.totalorder %s10, 0
    %p84 = por %p82, %p83
    %p85 = scmp.ne.s32.totalorder %s77, %s79
    %p86 = scmp.eq.s32.totalorder %s15, 1
    %p87 = por %p85, %p86
    %p88 = scmp.ne.s32.totalorder %s79, %s80
    %p89 = scmp.eq.s32.totalorder %s15, 0
    %p90 = por %p88, %p89
    %p91 = scmp.ne.s32.totalorder %s79, %s80
    %p92 = scmp.eq.s32.totalorder %s16, 1
    %p93 = por %p91, %p92
    %p95 = scmp.ne.s32.totalorder %s80, %s94
    %p96 = scmp.eq.s32.totalorder %s16, 0
    %p97 = por %p95, %p96
    %s99 = sadd.s32 %s98, 1
    %p102 = scmp.eq.s32.totalorder %s10, 1
    %p103 = scmp.ne.s32.totalorder %s98, %s100
    %p104 = scmp.eq.s32.totalorder %s10, 0
    %p105 = por %p103, %p104
    %p106 = scmp.ne.s32.totalorder %s98, %s100
    %p107 = scmp.eq.s32.totalorder %s15, 1
    %p108 = por %p106, %p107
    %p109 = scmp.ne.s32.totalorder %s100, %s101
    %p110 = scmp.eq.s32.totalorder %s15, 0
    %p111 = por %p109, %p110
    %p112 = scmp.ne.s32.totalorder %s100, %s101
    %p113 = scmp.eq.s32.totalorder %s16, 1
    %p114 = por %p112, %p113
    %p116 = scmp.ne.s32.totalorder %s101, %s115
    %p117 = scmp.eq.s32.totalorder %s16, 0
    %p118 = por %p116, %p117
    %s119 = ssub.s32 %s17, %s29
    %s120 = ssub.s32 %s18, %s25
    %s121 = sor.u32 %s119, %s120
    %p122 = scmp.eq.s32.totalorder %s121, 0
    %s124 = sadd.s32 %s123, 1
    %s125 = scalar_select %p122, %s123, %s124
    %p128 = pneg %p122
    %p129 = scmp.eq.s32.totalorder %s10, 1
    %p130 = por %p128, %p129
    %p131 = scmp.ne.s32.totalorder %s123, %s126
    %p132 = scmp.eq.s32.totalorder %s10, 0
    %p133 = por %p131, %p132
    %p134 = scmp.ne.s32.totalorder %s123, %s126
    %p135 = scmp.eq.s32.totalorder %s15, 1
    %p136 = por %p134, %p135
    %p137 = scmp.ne.s32.totalorder %s126, %s127
    %p138 = scmp.eq.s32.totalorder %s15, 0
    %p139 = por %p137, %p138
    %p140 = scmp.ne.s32.totalorder %s126, %s127
    %p141 = scmp.eq.s32.totalorder %s16, 1
    %p142 = por %p140, %p141
    %p144 = scmp.ne.s32.totalorder %s127, %s143
    %p145 = scmp.eq.s32.totalorder %s16, 0
    %p146 = por %p144, %p145
    %p147 = scmp.le.s32.totalorder 1, %s10
    %p148 = scmp.lt.s32.totalorder %s10, 3
    %p149 = pnand %p147, %p148
    %p150 = pneg %p149
    // Predicated region
    $region9: #{_lambda_.1} parent=5 // pred_check
      _
    $region10: #{_lambda_.1} parent=5 // pred_check_branch
      %152 = sbr.rel (%p149) target = $region12
    $region11: #{_lambda_.1} parent=5 // pred_region
      %s153 = ssub.s32 %s10, 1
      // Predicated region
      $region13: #{_lambda_.1} parent=11 // pred_check
        %p154 = pneg %p69
      $region14: #{_lambda_.1} parent=11 // pred_check_branch
        %156 = sbr.rel (%p154) target = $region16
      $region15: #{_lambda_.1} parent=11 // pred_region
        _
      $region16: #{_lambda_.1} parent=11 // pred_fallthru
        _
      // Predicated region
      $region17: #{_lambda_.1} parent=11 // pred_check
        %p157 = pneg %p90
      $region18: #{_lambda_.1} parent=11 // pred_check_branch
        %159 = sbr.rel (%p157) target = $region20
      $region19: #{_lambda_.1} parent=11 // pred_region
        _
      $region20: #{_lambda_.1} parent=11 // pred_fallthru
        _
      // Predicated region
      $region21: #{_lambda_.1} parent=11 // pred_check
        %p160 = pneg %p111
      $region22: #{_lambda_.1} parent=11 // pred_check_branch
        %162 = sbr.rel (%p160) target = $region24
      $region23: #{_lambda_.1} parent=11 // pred_region
        _
      $region24: #{_lambda_.1} parent=11 // pred_fallthru
        _
    $region12: #{_lambda_.1} parent=5 // pred_fallthru
      _
    %p163 = scmp.lt.s32.totalorder %s10, 2
    // Predicated region
    $region25: #{_lambda_.1} parent=5 // pred_check
      %p164 = pneg %p163
    $region26: #{_lambda_.1} parent=5 // pred_check_branch
      %166 = sbr.rel (%p164) target = $region28
    $region27: #{_lambda_.1} parent=5 // pred_region
      // Predicated region
      $region29: #{_lambda_.1} parent=27 // pred_check
        %p167 = pneg %p42
      $region30: #{_lambda_.1} parent=27 // pred_check_branch
        %169 = sbr.rel (%p167) target = $region32
      $region31: #{_lambda_.1} parent=27 // pred_region
        %p170 = scmp.lt.s32.totalorder %s17, 1
        %s171 = scalar_select %p170, %s17, 1
        %s172 = smul.addr %s171, 51
        %s173 = smul.addr %s172, 4
        %s174 = scalar_lea.vmem %s0, %s173
      $region32: #{_lambda_.1} parent=27 // pred_fallthru
        _
    $region28: #{_lambda_.1} parent=5 // pred_fallthru
      _
    %p175 = scmp.le.s32.totalorder 1, %s10
    %p176 = scmp.lt.s32.totalorder %s10, 3
    %p177 = pnand %p175, %p176
    %p178 = pneg %p177
    // Predicated region
    $region33: #{_lambda_.1} parent=5 // pred_check
      _
    $region34: #{_lambda_.1} parent=5 // pred_check_branch
      %180 = sbr.rel (%p177) target = $region36
    $region35: #{_lambda_.1} parent=5 // pred_region
      %s181 = ssub.s32 %s10, 1
      %p182 = scmp.lt.s32.totalorder %s19, 1
      %s183 = scalar_select %p182, %s19, 1
      %s184 = smul.addr %s183, 51
      %s185 = smul.addr %s184, 4
      %s186 = scalar_lea.vmem %s0, %s185
      %p187 = pneg %p48
      %p188 = pneg %p45
      %p189 = pneg %p69
      %p190 = pneg %p66
      %p191 = pneg %p90
      %p192 = pneg %p87
      %p193 = pneg %p111
      %p194 = pneg %p108
      %p195 = pneg %p139
      %p196 = pneg %p136
      %s197 = smul.u32 16, %s20
      %p198 = scmp.lt.s32.totalorder %s19, 1
      %s199 = scalar_select %p198, %s19, 1
      %p200 = scmp.lt.s32.totalorder %s197, 15
      %s201 = scalar_select %p200, %s197, 15
      %s202 = smul.addr %s201, 2
      %s203 = smul.addr %s199, 32
      %s204 = sadd.s32 %s202, %s203
      %s205 = smul.addr %s204, 4
      %s206 = scalar_lea.vmem %s4, %s205
      %p207 = scmp.lt.s32.totalorder %s19, 1
      %s208 = scalar_select %p207, %s19, 1
      %s209 = smul.addr %s208, 51
      %s210 = smul.addr %s209, 4
      %s211 = scalar_lea.vmem %s0, %s210
      %s212 = smul.u32 16, %s20
      %p213 = scmp.lt.s32.totalorder %s19, 1
      %s214 = scalar_select %p213, %s19, 1
      %p215 = scmp.lt.s32.totalorder %s212, 15
      %s216 = scalar_select %p215, %s212, 15
      %s217 = smul.addr %s216, 2
      %s218 = smul.addr %s214, 32
      %s219 = sadd.s32 %s217, %s218
      %s220 = smul.addr %s219, 4
      %s221 = scalar_lea.vmem %s4, %s220
      %s222 = smul.u32 16, %s20
      %s224 = smul.u32 %s20, 16
      %s225 = smul.u32 %s224, 3
      %s226 = smul.addr %s225, 4
      %s227 = scalar_lea.vmem %s211, %s226
      %v228 = vld [vmem:[%s227] sm:$0xf]
      %v229 = vld [vmem:[%s227 + $0x4] sm:$0xf]
      %v230 = vld [vmem:[%s227 + $0xc] sm:$0xf]
      %v231 = vld [vmem:[%s227 + $0x10] sm:$0xf]
      %v232 = vld [vmem:[%s227 + $0x18] sm:$0xf]
      %v233 = vld [vmem:[%s227 + $0x1c] sm:$0xf]
      %v234 = vld [vmem:[%s227 + $0x24] sm:$0xf]
      %v235 = vld [vmem:[%s227 + $0x28] sm:$0xf]
      %v236 = vld [vmem:[%s227 + $0x30] sm:$0xf]
      %v237 = vld [vmem:[%s227 + $0x34] sm:$0xf]
      %v238 = vld [vmem:[%s227 + $0x3c] sm:$0xf]
      %v239 = vld [vmem:[%s227 + $0x40] sm:$0xf]
      %v240 = vld [vmem:[%s227 + $0x48] sm:$0xf]
      %v241 = vld [vmem:[%s227 + $0x4c] sm:$0xf]
      %v242 = vld [vmem:[%s227 + $0x54] sm:$0xf]
      %v243 = vld [vmem:[%s227 + $0x58] sm:$0xf]
      %v244 = vld [vmem:[%s227 + $0x60] sm:$0xf]
      %v245 = vld [vmem:[%s227 + $0x64] sm:$0xf]
      %v246 = vld [vmem:[%s227 + $0x6c] sm:$0xf]
      %v247 = vld [vmem:[%s227 + $0x70] sm:$0xf]
      %v248 = vld [vmem:[%s227 + $0x78] sm:$0xf]
      %v249 = vld [vmem:[%s227 + $0x7c] sm:$0xf]
      %v250 = vld [vmem:[%s227 + $0x84] sm:$0xf]
      %v251 = vld [vmem:[%s227 + $0x88] sm:$0xf]
      %v252 = vld [vmem:[%s227 + $0x90] sm:$0xf]
      %v253 = vld [vmem:[%s227 + $0x94] sm:$0xf]
      %v254 = vld [vmem:[%s227 + $0x9c] sm:$0xf]
      %v255 = vld [vmem:[%s227 + $0xa0] sm:$0xf]
      %v256 = vld [vmem:[%s227 + $0xa8] sm:$0xf]
      %v257 = vld [vmem:[%s227 + $0xac] sm:$0xf]
      %v258 = vld [vmem:[%s227 + $0xb4] sm:$0xf]
      %v259 = vld [vmem:[%s227 + $0xb8] sm:$0xf]
      %v260 = vld [vmem:[%s1] sm:$0xf]
      %v261 = vld [vmem:[%s1 + $0x4] sm:$0xf]
      %v262 = vld [vmem:[%s1 + $0x8] sm:$0xf]
      %v263 = vld [vmem:[%s1 + $0xc] sm:$0xf]
      %v264 = vld [vmem:[%s1 + $0x10] sm:$0xf]
      %v265 = vld [vmem:[%s1 + $0x14] sm:$0xf]
      %v266 = vld [vmem:[%s1 + $0x18] sm:$0xf]
      %v267 = vld [vmem:[%s1 + $0x1c] sm:$0xf]
      %v268 = vld [vmem:[%s227 + $0x8] sm:$0x1]
      %v269 = vld [vmem:[%s227 + $0x14] sm:$0x1]
      %v270 = vld [vmem:[%s227 + $0x20] sm:$0x1]
      %v271 = vld [vmem:[%s227 + $0x2c] sm:$0x1]
      %v272 = vld [vmem:[%s227 + $0x38] sm:$0x1]
      %v273 = vld [vmem:[%s227 + $0x44] sm:$0x1]
      %v274 = vld [vmem:[%s227 + $0x50] sm:$0x1]
      %v275 = vld [vmem:[%s227 + $0x5c] sm:$0x1]
      %v276 = vld [vmem:[%s227 + $0x68] sm:$0x1]
      %v277 = vld [vmem:[%s227 + $0x74] sm:$0x1]
      %v278 = vld [vmem:[%s227 + $0x80] sm:$0x1]
      %v279 = vld [vmem:[%s227 + $0x8c] sm:$0x1]
      %v280 = vld [vmem:[%s227 + $0x98] sm:$0x1]
      %v281 = vld [vmem:[%s227 + $0xa4] sm:$0x1]
      %v282 = vld [vmem:[%s227 + $0xb0] sm:$0x1]
      %v283 = vld [vmem:[%s227 + $0xbc] sm:$0x1]
      %vm284 = vsmask.f32 3328
      %vm285 = vsmask.f32 7440
      %vm286 = vmor %vm284, %vm285
      %v288 = vshrl.u32 %v228, 16
      %v290 = vrot.slane %v288, 4
      %v291 = vshll.u32 %v228, 16
      %v293 = vrot.slane %v291, 5
      %v294 = vor.u32 %v290, %v293
      %v295 = vrot.slane %v294, 4
      %v297 = vshll.u32 %v229, 16
      %v299 = vrot.slane %v297, 5
      %v300 = vsel %vm286, %v295, %v299
      %v301 = vshrl.u32 %v229, 16
      %v303 = vrot.slane %v301, 4
      %v304 = vor.u32 %v303, %v299
      %v305 = vrot.slane %v304, 4
      %v307 = vshll.u32 %v268, 16
      %v309 = vrot.slane %v307, 5
      %v310 = vsel %vm286, %v305, %v309
      %v312 = vshrl.u32 %v230, 16
      %v314 = vrot.slane %v312, 4
      %v315 = vshll.u32 %v230, 16
      %v317 = vrot.slane %v315, 5
      %v318 = vor.u32 %v314, %v317
      %v319 = vrot.slane %v318, 4
      %v321 = vshll.u32 %v231, 16
      %v323 = vrot.slane %v321, 5
      %v324 = vsel %vm286, %v319, %v323
      %v325 = vshrl.u32 %v231, 16
      %v327 = vrot.slane %v325, 4
      %v328 = vor.u32 %v327, %v323
      %v329 = vrot.slane %v328, 4
      %v331 = vshll.u32 %v269, 16
      %v333 = vrot.slane %v331, 5
      %v334 = vsel %vm286, %v329, %v333
      %v336 = vshrl.u32 %v232, 16
      %v338 = vrot.slane %v336, 4
      %v339 = vshll.u32 %v232, 16
      %v341 = vrot.slane %v339, 5
      %v342 = vor.u32 %v338, %v341
      %v343 = vrot.slane %v342, 4
      %v345 = vshll.u32 %v233, 16
      %v347 = vrot.slane %v345, 5
      %v348 = vsel %vm286, %v343, %v347
      %v349 = vshrl.u32 %v233, 16
      %v351 = vrot.slane %v349, 4
      %v352 = vor.u32 %v351, %v347
      %v353 = vrot.slane %v352, 4
      %v355 = vshll.u32 %v270, 16
      %v357 = vrot.slane %v355, 5
      %v358 = vsel %vm286, %v353, %v357
      %v360 = vshrl.u32 %v234, 16
      %v362 = vrot.slane %v360, 4
      %v363 = vshll.u32 %v234, 16
      %v365 = vrot.slane %v363, 5
      %v366 = vor.u32 %v362, %v365
      %v367 = vrot.slane %v366, 4
      %v369 = vshll.u32 %v235, 16
      %v371 = vrot.slane %v369, 5
      %v372 = vsel %vm286, %v367, %v371
      %v373 = vshrl.u32 %v235, 16
      %v375 = vrot.slane %v373, 4
      %v376 = vor.u32 %v375, %v371
      %v377 = vrot.slane %v376, 4
      %v379 = vshll.u32 %v271, 16
      %v381 = vrot.slane %v379, 5
      %v382 = vsel %vm286, %v377, %v381
      %v384 = vshrl.u32 %v236, 16
      %v386 = vrot.slane %v384, 4
      %v387 = vshll.u32 %v236, 16
      %v389 = vrot.slane %v387, 5
      %v390 = vor.u32 %v386, %v389
      %v391 = vrot.slane %v390, 4
      %v393 = vshll.u32 %v237, 16
      %v395 = vrot.slane %v393, 5
      %v396 = vsel %vm286, %v391, %v395
      %v397 = vshrl.u32 %v237, 16
      %v399 = vrot.slane %v397, 4
      %v400 = vor.u32 %v399, %v395
      %v401 = vrot.slane %v400, 4
      %v403 = vshll.u32 %v272, 16
      %v405 = vrot.slane %v403, 5
      %v406 = vsel %vm286, %v401, %v405
      %v408 = vshrl.u32 %v238, 16
      %v410 = vrot.slane %v408, 4
      %v411 = vshll.u32 %v238, 16
      %v413 = vrot.slane %v411, 5
      %v414 = vor.u32 %v410, %v413
      %v415 = vrot.slane %v414, 4
      %v417 = vshll.u32 %v239, 16
      %v419 = vrot.slane %v417, 5
      %v420 = vsel %vm286, %v415, %v419
      %v421 = vshrl.u32 %v239, 16
      %v423 = vrot.slane %v421, 4
      %v424 = vor.u32 %v423, %v419
      %v425 = vrot.slane %v424, 4
      %v427 = vshll.u32 %v273, 16
      %v429 = vrot.slane %v427, 5
      %v430 = vsel %vm286, %v425, %v429
      %v432 = vshrl.u32 %v240, 16
      %v434 = vrot.slane %v432, 4
      %v435 = vshll.u32 %v240, 16
      %v437 = vrot.slane %v435, 5
      %v438 = vor.u32 %v434, %v437
      %v439 = vrot.slane %v438, 4
      %v441 = vshll.u32 %v241, 16
      %v443 = vrot.slane %v441, 5
      %v444 = vsel %vm286, %v439, %v443
      %v445 = vshrl.u32 %v241, 16
      %v447 = vrot.slane %v445, 4
      %v448 = vor.u32 %v447, %v443
      %v449 = vrot.slane %v448, 4
      %v451 = vshll.u32 %v274, 16
      %v453 = vrot.slane %v451, 5
      %v454 = vsel %vm286, %v449, %v453
      %v456 = vshrl.u32 %v242, 16
      %v458 = vrot.slane %v456, 4
      %v459 = vshll.u32 %v242, 16
      %v461 = vrot.slane %v459, 5
      %v462 = vor.u32 %v458, %v461
      %v463 = vrot.slane %v462, 4
      %v465 = vshll.u32 %v243, 16
      %v467 = vrot.slane %v465, 5
      %v468 = vsel %vm286, %v463, %v467
      %v469 = vshrl.u32 %v243, 16
      %v471 = vrot.slane %v469, 4
      %v472 = vor.u32 %v471, %v467
      %v473 = vrot.slane %v472, 4
      %v475 = vshll.u32 %v275, 16
      %v477 = vrot.slane %v475, 5
      %v478 = vsel %vm286, %v473, %v477
      %v480 = vshrl.u32 %v244, 16
      %v482 = vrot.slane %v480, 4
      %v483 = vshll.u32 %v244, 16
      %v485 = vrot.slane %v483, 5
      %v486 = vor.u32 %v482, %v485
      %v487 = vrot.slane %v486, 4
      %v489 = vshll.u32 %v245, 16
      %v491 = vrot.slane %v489, 5
      %v492 = vsel %vm286, %v487, %v491
      %v493 = vshrl.u32 %v245, 16
      %v495 = vrot.slane %v493, 4
      %v496 = vor.u32 %v495, %v491
      %v497 = vrot.slane %v496, 4
      %v499 = vshll.u32 %v276, 16
      %v501 = vrot.slane %v499, 5
      %v502 = vsel %vm286, %v497, %v501
      %v504 = vshrl.u32 %v246, 16
      %v506 = vrot.slane %v504, 4
      %v507 = vshll.u32 %v246, 16
      %v509 = vrot.slane %v507, 5
      %v510 = vor.u32 %v506, %v509
      %v511 = vrot.slane %v510, 4
      %v513 = vshll.u32 %v247, 16
      %v515 = vrot.slane %v513, 5
      %v516 = vsel %vm286, %v511, %v515
      %v517 = vshrl.u32 %v247, 16
      %v519 = vrot.slane %v517, 4
      %v520 = vor.u32 %v519, %v515
      %v521 = vrot.slane %v520, 4
      %v523 = vshll.u32 %v277, 16
      %v525 = vrot.slane %v523, 5
      %v526 = vsel %vm286, %v521, %v525
      %v528 = vshrl.u32 %v248, 16
      %v530 = vrot.slane %v528, 4
      %v531 = vshll.u32 %v248, 16
      %v533 = vrot.slane %v531, 5
      %v534 = vor.u32 %v530, %v533
      %v535 = vrot.slane %v534, 4
      %v537 = vshll.u32 %v249, 16
      %v539 = vrot.slane %v537, 5
      %v540 = vsel %vm286, %v535, %v539
      %v541 = vshrl.u32 %v249, 16
      %v543 = vrot.slane %v541, 4
      %v544 = vor.u32 %v543, %v539
      %v545 = vrot.slane %v544, 4
      %v547 = vshll.u32 %v278, 16
      %v549 = vrot.slane %v547, 5
      %v550 = vsel %vm286, %v545, %v549
      %v552 = vshrl.u32 %v250, 16
      %v554 = vrot.slane %v552, 4
      %v555 = vshll.u32 %v250, 16
      %v557 = vrot.slane %v555, 5
      %v558 = vor.u32 %v554, %v557
      %v559 = vrot.slane %v558, 4
      %v561 = vshll.u32 %v251, 16
      %v563 = vrot.slane %v561, 5
      %v564 = vsel %vm286, %v559, %v563
      %v565 = vshrl.u32 %v251, 16
      %v567 = vrot.slane %v565, 4
      %v568 = vor.u32 %v567, %v563
      %v569 = vrot.slane %v568, 4
      %v571 = vshll.u32 %v279, 16
      %v573 = vrot.slane %v571, 5
      %v574 = vsel %vm286, %v569, %v573
      %v576 = vshrl.u32 %v252, 16
      %v578 = vrot.slane %v576, 4
      %v579 = vshll.u32 %v252, 16
      %v581 = vrot.slane %v579, 5
      %v582 = vor.u32 %v578, %v581
      %v583 = vrot.slane %v582, 4
      %v585 = vshll.u32 %v253, 16
      %v587 = vrot.slane %v585, 5
      %v588 = vsel %vm286, %v583, %v587
      %v589 = vshrl.u32 %v253, 16
      %v591 = vrot.slane %v589, 4
      %v592 = vor.u32 %v591, %v587
      %v593 = vrot.slane %v592, 4
      %v595 = vshll.u32 %v280, 16
      %v597 = vrot.slane %v595, 5
      %v598 = vsel %vm286, %v593, %v597
      %v600 = vshrl.u32 %v254, 16
      %v602 = vrot.slane %v600, 4
      %v603 = vshll.u32 %v254, 16
      %v605 = vrot.slane %v603, 5
      %v606 = vor.u32 %v602, %v605
      %v607 = vrot.slane %v606, 4
      %v609 = vshll.u32 %v255, 16
      %v611 = vrot.slane %v609, 5
      %v612 = vsel %vm286, %v607, %v611
      %v613 = vshrl.u32 %v255, 16
      %v615 = vrot.slane %v613, 4
      %v616 = vor.u32 %v615, %v611
      %v617 = vrot.slane %v616, 4
      %v619 = vshll.u32 %v281, 16
      %v621 = vrot.slane %v619, 5
      %v622 = vsel %vm286, %v617, %v621
      %v624 = vshrl.u32 %v256, 16
      %v626 = vrot.slane %v624, 4
      %v627 = vshll.u32 %v256, 16
      %v629 = vrot.slane %v627, 5
      %v630 = vor.u32 %v626, %v629
      %v631 = vrot.slane %v630, 4
      %v633 = vshll.u32 %v257, 16
      %v635 = vrot.slane %v633, 5
      %v636 = vsel %vm286, %v631, %v635
      %v637 = vshrl.u32 %v257, 16
      %v639 = vrot.slane %v637, 4
      %v640 = vor.u32 %v639, %v635
      %v641 = vrot.slane %v640, 4
      %v643 = vshll.u32 %v282, 16
      %v645 = vrot.slane %v643, 5
      %v646 = vsel %vm286, %v641, %v645
      %v648 = vshrl.u32 %v258, 16
      %v650 = vrot.slane %v648, 4
      %v651 = vshll.u32 %v258, 16
      %v653 = vrot.slane %v651, 5
      %v654 = vor.u32 %v650, %v653
      %v655 = vrot.slane %v654, 4
      %v657 = vshll.u32 %v259, 16
      %v659 = vrot.slane %v657, 5
      %v660 = vsel %vm286, %v655, %v659
      %v661 = vshrl.u32 %v259, 16
      %v663 = vrot.slane %v661, 4
      %v664 = vor.u32 %v663, %v659
      %v665 = vrot.slane %v664, 4
      %v667 = vshll.u32 %v283, 16
      %v669 = vrot.slane %v667, 5
      %v670 = vsel %vm286, %v665, %v669
      %s671 = scalar_lea.vmem %s1, 32
      %v672 = vld [vmem:[%s671] sm:$0xf]
      %v673 = vld [vmem:[%s671 + $0x4] sm:$0xf]
      %v674 = vld [vmem:[%s671 + $0x8] sm:$0xf]
      %v675 = vld [vmem:[%s671 + $0xc] sm:$0xf]
      %v676 = vld [vmem:[%s671 + $0x10] sm:$0xf]
      %v677 = vld [vmem:[%s671 + $0x14] sm:$0xf]
      %v678 = vld [vmem:[%s671 + $0x18] sm:$0xf]
      %v679 = vld [vmem:[%s671 + $0x1c] sm:$0xf]
      %v680 = vunpack.c.l.b16 %v300
      %v681 = vunpack.c.l.b16 %v310
      %v682 = vunpack.c.l.b16 %v324
      %v683 = vunpack.c.l.b16 %v334
      %v684 = vunpack.c.l.b16 %v348
      %v685 = vunpack.c.l.b16 %v358
      %v686 = vunpack.c.l.b16 %v372
      %v687 = vunpack.c.l.b16 %v382
      %v688 = vunpack.c.l.b16 %v396
      %v689 = vunpack.c.l.b16 %v406
      %v690 = vunpack.c.l.b16 %v420
      %v691 = vunpack.c.l.b16 %v430
      %v692 = vunpack.c.l.b16 %v444
      %v693 = vunpack.c.l.b16 %v454
      %v694 = vunpack.c.l.b16 %v468
      %v695 = vunpack.c.l.b16 %v478
      %v696 = vunpack.c.l.b16 %v492
      %v697 = vunpack.c.l.b16 %v502
      %v698 = vunpack.c.l.b16 %v516
      %v699 = vunpack.c.l.b16 %v526
      %v700 = vunpack.c.l.b16 %v540
      %v701 = vunpack.c.l.b16 %v550
      %v702 = vunpack.c.l.b16 %v564
      %v703 = vunpack.c.l.b16 %v574
      %v704 = vunpack.c.l.b16 %v588
      %v705 = vunpack.c.l.b16 %v598
      %v706 = vunpack.c.l.b16 %v612
      %v707 = vunpack.c.l.b16 %v622
      %v708 = vunpack.c.l.b16 %v636
      %v709 = vunpack.c.l.b16 %v646
      %v710 = vunpack.c.l.b16 %v660
      %v711 = vunpack.c.l.b16 %v670
      %v712 = vpack.c.b16 %v681, %v680
      %v713 = vpack.c.b16 %v683, %v682
      %v714 = vpack.c.b16 %v685, %v684
      %v715 = vpack.c.b16 %v687, %v686
      %v716 = vpack.c.b16 %v689, %v688
      %v717 = vpack.c.b16 %v691, %v690
      %v718 = vpack.c.b16 %v693, %v692
      %v719 = vpack.c.b16 %v695, %v694
      %v720 = vpack.c.b16 %v697, %v696
      %v721 = vpack.c.b16 %v699, %v698
      %v722 = vpack.c.b16 %v701, %v700
      %v723 = vpack.c.b16 %v703, %v702
      %v724 = vpack.c.b16 %v705, %v704
      %v725 = vpack.c.b16 %v707, %v706
      %v726 = vpack.c.b16 %v709, %v708
      %v727 = vpack.c.b16 %v711, %v710
      %v736 = vunpack.c.l.b16 %v672
      %v737 = vunpack.c.l.b16 %v673
      %v738 = vunpack.c.l.b16 %v674
      %v739 = vunpack.c.l.b16 %v675
      %v740 = vunpack.c.l.b16 %v676
      %v741 = vunpack.c.l.b16 %v677
      %v742 = vunpack.c.l.b16 %v678
      %v743 = vunpack.c.l.b16 %v679
      %v744 = vpack.c.b16 %v737, %v736
      %v745 = vpack.c.b16 %v739, %v738
      %v746 = vpack.c.b16 %v741, %v740
      %v747 = vpack.c.b16 %v743, %v742
      %vm752 = vcmask 523264
      %v754 = vsel %vm752, %v712, 0
      %v757 = vsel %vm752, %v713, 0
      %v760 = vsel %vm752, %v714, 0
      %v763 = vsel %vm752, %v715, 0
      %v766 = vsel %vm752, %v716, 0
      %v769 = vsel %vm752, %v717, 0
      %v772 = vsel %vm752, %v718, 0
      %v775 = vsel %vm752, %v719, 0
      %v778 = vsel %vm752, %v720, 0
      %v781 = vsel %vm752, %v721, 0
      %v784 = vsel %vm752, %v722, 0
      %v787 = vsel %vm752, %v723, 0
      %v790 = vsel %vm752, %v724, 0
      %v793 = vsel %vm752, %v725, 0
      %v796 = vsel %vm752, %v726, 0
      %v799 = vsel %vm752, %v727, 0
      %801 = vmatprep.subr.bf16.mxu0 0
      %802 = vmatpush1.bf16.msra.mxu0 0
      %803 = vmatprep.subr.bf16.mxu0 0
      %804 = vmatpush1.bf16.msra.mxu0 0
      %805 = vmatprep.subr.bf16.mxu0 0
      %806 = vmatpush1.bf16.msra.mxu0 0
      %807 = vmatprep.subr.bf16.mxu0 0
      %808 = vmatpush1.bf16.msra.mxu0 0
      %809 = vmatprep.subr.bf16.mxu0 0
      %810 = vmatpush1.bf16.msra.mxu0 %v747
      %811 = vmatprep.subr.bf16.mxu0 0
      %812 = vmatpush1.bf16.msra.mxu0 %v746
      %813 = vmatprep.subr.bf16.mxu0 0
      %814 = vmatpush1.bf16.msra.mxu0 %v745
      %815 = vmatprep.subr.bf16.mxu0 0
      %816 = vmatpush1.bf16.msra.mxu0 %v744
      %817 = vmatprep.subr.bf16.mxu0 0
      %818 = vmatpush2.bf16.msra.mxu0 0
      %819 = vmatprep.subr.bf16.mxu0 0
      %820 = vmatpush2.bf16.msra.mxu0 0
      %821 = vmatprep.subr.bf16.mxu0 0
      %822 = vmatpush2.bf16.msra.mxu0 0
      %823 = vmatprep.subr.bf16.mxu0 0
      %824 = vmatpush2.bf16.msra.mxu0 0
      %825 = vmatprep.subr.bf16.mxu0 0
      %826 = vmatpush2.bf16.msra.mxu0 0
      %827 = vmatprep.subr.bf16.mxu0 0
      %828 = vmatpush2.bf16.msra.mxu0 0
      %829 = vmatprep.subr.bf16.mxu0 0
      %830 = vmatpush2.bf16.msra.mxu0 0
      %831 = vmatprep.subr.bf16.mxu0 0
      %832 = vmatpush2.bf16.msra.mxu0 0
      %833 = vmatprep.mubr.bf16.mxu0 0
      %834 = vmatmul.mubr.bf16.gmra.mxu0 %v754
      %v835 = vpop.f32.mrf.mxu0
      %v836 = vadd.f32 0.0, %v835
      %v837 = vpop.f32.mrf.mxu0
      %v838 = vpop.f32.mrf.mxu0
      %v839 = vadd.f32 0.0, %v838
      %v840 = vpop.f32.mrf.mxu0
      %841 = vmatprep.mubr.bf16.mxu0 0
      %842 = vmatmul.mubr.bf16.gmra.mxu0 %v757
      %v843 = vpop.f32.mrf.mxu0
      %v844 = vadd.f32 0.0, %v843
      %v845 = vpop.f32.mrf.mxu0
      %v846 = vpop.f32.mrf.mxu0
      %v847 = vadd.f32 0.0, %v846
      %v848 = vpop.f32.mrf.mxu0
      %849 = vmatprep.mubr.bf16.mxu0 0
      %850 = vmatmul.mubr.bf16.gmra.mxu0 %v760
      %v851 = vpop.f32.mrf.mxu0
      %v852 = vadd.f32 0.0, %v851
      %v853 = vpop.f32.mrf.mxu0
      %v854 = vpop.f32.mrf.mxu0
      %v855 = vadd.f32 0.0, %v854
      %v856 = vpop.f32.mrf.mxu0
      %857 = vmatprep.mubr.bf16.mxu0 0
      %858 = vmatmul.mubr.bf16.gmra.mxu0 %v763
      %v859 = vpop.f32.mrf.mxu0
      %v860 = vadd.f32 0.0, %v859
      %v861 = vpop.f32.mrf.mxu0
      %v862 = vpop.f32.mrf.mxu0
      %v863 = vadd.f32 0.0, %v862
      %v864 = vpop.f32.mrf.mxu0
      %865 = vmatprep.mubr.bf16.mxu0 0
      %866 = vmatmul.mubr.bf16.gmra.mxu0 %v766
      %v867 = vpop.f32.mrf.mxu0
      %v868 = vadd.f32 0.0, %v867
      %v869 = vpop.f32.mrf.mxu0
      %v870 = vpop.f32.mrf.mxu0
      %v871 = vadd.f32 0.0, %v870
      %v872 = vpop.f32.mrf.mxu0
      %873 = vmatprep.mubr.bf16.mxu0 0
      %874 = vmatmul.mubr.bf16.gmra.mxu0 %v769
      %v875 = vpop.f32.mrf.mxu0
      %v876 = vadd.f32 0.0, %v875
      %v877 = vpop.f32.mrf.mxu0
      %v878 = vpop.f32.mrf.mxu0
      %v879 = vadd.f32 0.0, %v878
      %v880 = vpop.f32.mrf.mxu0
      %881 = vmatprep.mubr.bf16.mxu0 0
      %882 = vmatmul.mubr.bf16.gmra.mxu0 %v772
      %v883 = vpop.f32.mrf.mxu0
      %v884 = vadd.f32 0.0, %v883
      %v885 = vpop.f32.mrf.mxu0
      %v886 = vpop.f32.mrf.mxu0
      %v887 = vadd.f32 0.0, %v886
      %v888 = vpop.f32.mrf.mxu0
      %889 = vmatprep.mubr.bf16.mxu0 0
      %890 = vmatmul.mubr.bf16.gmra.mxu0 %v775
      %v891 = vpop.f32.mrf.mxu0
      %v892 = vadd.f32 0.0, %v891
      %v893 = vpop.f32.mrf.mxu0
      %v894 = vpop.f32.mrf.mxu0
      %v895 = vadd.f32 0.0, %v894
      %v896 = vpop.f32.mrf.mxu0
      %897 = vmatprep.mubr.bf16.mxu0 0
      %898 = vmatmul.mubr.bf16.gmra.mxu0 %v778
      %v899 = vpop.f32.mrf.mxu0
      %v900 = vadd.f32 0.0, %v899
      %v901 = vpop.f32.mrf.mxu0
      %v902 = vpop.f32.mrf.mxu0
      %v903 = vadd.f32 0.0, %v902
      %v904 = vpop.f32.mrf.mxu0
      %905 = vmatprep.mubr.bf16.mxu0 0
      %906 = vmatmul.mubr.bf16.gmra.mxu0 %v781
      %v907 = vpop.f32.mrf.mxu0
      %v908 = vadd.f32 0.0, %v907
      %v909 = vpop.f32.mrf.mxu0
      %v910 = vpop.f32.mrf.mxu0
      %v911 = vadd.f32 0.0, %v910
      %v912 = vpop.f32.mrf.mxu0
      %913 = vmatprep.mubr.bf16.mxu0 0
      %914 = vmatmul.mubr.bf16.gmra.mxu0 %v784
      %v915 = vpop.f32.mrf.mxu0
      %v916 = vadd.f32 0.0, %v915
      %v917 = vpop.f32.mrf.mxu0
      %v918 = vpop.f32.mrf.mxu0
      %v919 = vadd.f32 0.0, %v918
      %v920 = vpop.f32.mrf.mxu0
      %921 = vmatprep.mubr.bf16.mxu0 0
      %922 = vmatmul.mubr.bf16.gmra.mxu0 %v787
      %v923 = vpop.f32.mrf.mxu0
      %v924 = vadd.f32 0.0, %v923
      %v925 = vpop.f32.mrf.mxu0
      %v926 = vpop.f32.mrf.mxu0
      %v927 = vadd.f32 0.0, %v926
      %v928 = vpop.f32.mrf.mxu0
      %929 = vmatprep.mubr.bf16.mxu0 0
      %930 = vmatmul.mubr.bf16.gmra.mxu0 %v790
      %v931 = vpop.f32.mrf.mxu0
      %v932 = vadd.f32 0.0, %v931
      %v933 = vpop.f32.mrf.mxu0
      %v934 = vpop.f32.mrf.mxu0
      %v935 = vadd.f32 0.0, %v934
      %v936 = vpop.f32.mrf.mxu0
      %937 = vmatprep.mubr.bf16.mxu0 0
      %938 = vmatmul.mubr.bf16.gmra.mxu0 %v793
      %v939 = vpop.f32.mrf.mxu0
      %v940 = vadd.f32 0.0, %v939
      %v941 = vpop.f32.mrf.mxu0
      %v942 = vpop.f32.mrf.mxu0
      %v943 = vadd.f32 0.0, %v942
      %v944 = vpop.f32.mrf.mxu0
      %945 = vmatprep.mubr.bf16.mxu0 0
      %946 = vmatmul.mubr.bf16.gmra.mxu0 %v796
      %v947 = vpop.f32.mrf.mxu0
      %v948 = vadd.f32 0.0, %v947
      %v949 = vpop.f32.mrf.mxu0
      %v950 = vpop.f32.mrf.mxu0
      %v951 = vadd.f32 0.0, %v950
      %v952 = vpop.f32.mrf.mxu0
      %953 = vmatprep.mubr.bf16.mxu0 0
      %954 = vmatmul.mubr.bf16.gmra.mxu0 %v799
      %v955 = vpop.f32.mrf.mxu0
      %v956 = vadd.f32 0.0, %v955
      %v957 = vpop.f32.mrf.mxu0
      %v958 = vpop.f32.mrf.mxu0
      %v959 = vadd.f32 0.0, %v958
      %v960 = vpop.f32.mrf.mxu0
      %961 = vdwg.mxu0
      %v994 = vunpack.c.l.b16 %v228
      %v995 = vunpack.c.l.b16 %v229
      %v996 = vunpack.c.l.b16 %v230
      %v997 = vunpack.c.l.b16 %v231
      %v998 = vunpack.c.l.b16 %v232
      %v999 = vunpack.c.l.b16 %v233
      %v1000 = vunpack.c.l.b16 %v234
      %v1001 = vunpack.c.l.b16 %v235
      %v1002 = vunpack.c.l.b16 %v236
      %v1003 = vunpack.c.l.b16 %v237
      %v1004 = vunpack.c.l.b16 %v238
      %v1005 = vunpack.c.l.b16 %v239
      %v1006 = vunpack.c.l.b16 %v240
      %v1007 = vunpack.c.l.b16 %v241
      %v1008 = vunpack.c.l.b16 %v242
      %v1009 = vunpack.c.l.b16 %v243
      %v1010 = vunpack.c.l.b16 %v244
      %v1011 = vunpack.c.l.b16 %v245
      %v1012 = vunpack.c.l.b16 %v246
      %v1013 = vunpack.c.l.b16 %v247
      %v1014 = vunpack.c.l.b16 %v248
      %v1015 = vunpack.c.l.b16 %v249
      %v1016 = vunpack.c.l.b16 %v250
      %v1017 = vunpack.c.l.b16 %v251
      %v1018 = vunpack.c.l.b16 %v252
      %v1019 = vunpack.c.l.b16 %v253
      %v1020 = vunpack.c.l.b16 %v254
      %v1021 = vunpack.c.l.b16 %v255
      %v1022 = vunpack.c.l.b16 %v256
      %v1023 = vunpack.c.l.b16 %v257
      %v1024 = vunpack.c.l.b16 %v258
      %v1025 = vunpack.c.l.b16 %v259
      %v1026 = vpack.c.b16 %v995, %v994
      %v1027 = vpack.c.b16 %v997, %v996
      %v1028 = vpack.c.b16 %v999, %v998
      %v1029 = vpack.c.b16 %v1001, %v1000
      %v1030 = vpack.c.b16 %v1003, %v1002
      %v1031 = vpack.c.b16 %v1005, %v1004
      %v1032 = vpack.c.b16 %v1007, %v1006
      %v1033 = vpack.c.b16 %v1009, %v1008
      %v1034 = vpack.c.b16 %v1011, %v1010
      %v1035 = vpack.c.b16 %v1013, %v1012
      %v1036 = vpack.c.b16 %v1015, %v1014
      %v1037 = vpack.c.b16 %v1017, %v1016
      %v1038 = vpack.c.b16 %v1019, %v1018
      %v1039 = vpack.c.b16 %v1021, %v1020
      %v1040 = vpack.c.b16 %v1023, %v1022
      %v1041 = vpack.c.b16 %v1025, %v1024
      %v1050 = vunpack.c.l.b16 %v260
      %v1051 = vunpack.c.l.b16 %v261
      %v1052 = vunpack.c.l.b16 %v262
      %v1053 = vunpack.c.l.b16 %v263
      %v1054 = vunpack.c.l.b16 %v264
      %v1055 = vunpack.c.l.b16 %v265
      %v1056 = vunpack.c.l.b16 %v266
      %v1057 = vunpack.c.l.b16 %v267
      %v1058 = vpack.c.b16 %v1051, %v1050
      %v1059 = vpack.c.b16 %v1053, %v1052
      %v1060 = vpack.c.b16 %v1055, %v1054
      %v1061 = vpack.c.b16 %v1057, %v1056
      %v1067 = vsel %vm752, %v1026, 0
      %v1070 = vsel %vm752, %v1027, 0
      %v1073 = vsel %vm752, %v1028, 0
      %v1076 = vsel %vm752, %v1029, 0
      %v1079 = vsel %vm752, %v1030, 0
      %v1082 = vsel %vm752, %v1031, 0
      %v1085 = vsel %vm752, %v1032, 0
      %v1088 = vsel %vm752, %v1033, 0
      %v1091 = vsel %vm752, %v1034, 0
      %v1094 = vsel %vm752, %v1035, 0
      %v1097 = vsel %vm752, %v1036, 0
      %v1100 = vsel %vm752, %v1037, 0
      %v1103 = vsel %vm752, %v1038, 0
      %v1106 = vsel %vm752, %v1039, 0
      %v1109 = vsel %vm752, %v1040, 0
      %v1112 = vsel %vm752, %v1041, 0
      %1114 = vmatprep.subr.bf16.mxu0 0
      %1115 = vmatpush1.bf16.msra.mxu0 0
      %1116 = vmatprep.subr.bf16.mxu0 0
      %1117 = vmatpush1.bf16.msra.mxu0 0
      %1118 = vmatprep.subr.bf16.mxu0 0
      %1119 = vmatpush1.bf16.msra.mxu0 0
      %1120 = vmatprep.subr.bf16.mxu0 0
      %1121 = vmatpush1.bf16.msra.mxu0 0
      %1122 = vmatprep.subr.bf16.mxu0 0
      %1123 = vmatpush1.bf16.msra.mxu0 %v1061
      %1124 = vmatprep.subr.bf16.mxu0 0
      %1125 = vmatpush1.bf16.msra.mxu0 %v1060
      %1126 = vmatprep.subr.bf16.mxu0 0
      %1127 = vmatpush1.bf16.msra.mxu0 %v1059
      %1128 = vmatprep.subr.bf16.mxu0 0
      %1129 = vmatpush1.bf16.msra.mxu0 %v1058
      %1130 = vmatprep.subr.bf16.mxu0 0
      %1131 = vmatpush2.bf16.msra.mxu0 0
      %1132 = vmatprep.subr.bf16.mxu0 0
      %1133 = vmatpush2.bf16.msra.mxu0 0
      %1134 = vmatprep.subr.bf16.mxu0 0
      %1135 = vmatpush2.bf16.msra.mxu0 0
      %1136 = vmatprep.subr.bf16.mxu0 0
      %1137 = vmatpush2.bf16.msra.mxu0 0
      %1138 = vmatprep.subr.bf16.mxu0 0
      %1139 = vmatpush2.bf16.msra.mxu0 0
      %1140 = vmatprep.subr.bf16.mxu0 0
      %1141 = vmatpush2.bf16.msra.mxu0 0
      %1142 = vmatprep.subr.bf16.mxu0 0
      %1143 = vmatpush2.bf16.msra.mxu0 0
      %1144 = vmatprep.subr.bf16.mxu0 0
      %1145 = vmatpush2.bf16.msra.mxu0 0
      %1146 = vmatprep.mubr.bf16.mxu0 0
      %1147 = vmatmul.mubr.bf16.gmra.mxu0 %v1067
      %v1148 = vpop.f32.mrf.mxu0
      %v1149 = vadd.f32 %v836, %v1148
      %v1150 = vpop.f32.mrf.mxu0
      %v1151 = vpop.f32.mrf.mxu0
      %v1152 = vadd.f32 %v839, %v1151
      %v1153 = vpop.f32.mrf.mxu0
      %1154 = vmatprep.mubr.bf16.mxu0 0
      %1155 = vmatmul.mubr.bf16.gmra.mxu0 %v1070
      %v1156 = vpop.f32.mrf.mxu0
      %v1157 = vadd.f32 %v844, %v1156
      %v1158 = vpop.f32.mrf.mxu0
      %v1159 = vpop.f32.mrf.mxu0
      %v1160 = vadd.f32 %v847, %v1159
      %v1161 = vpop.f32.mrf.mxu0
      %1162 = vmatprep.mubr.bf16.mxu0 0
      %1163 = vmatmul.mubr.bf16.gmra.mxu0 %v1073
      %v1164 = vpop.f32.mrf.mxu0
      %v1165 = vadd.f32 %v852, %v1164
      %v1166 = vpop.f32.mrf.mxu0
      %v1167 = vpop.f32.mrf.mxu0
      %v1168 = vadd.f32 %v855, %v1167
      %v1169 = vpop.f32.mrf.mxu0
      %1170 = vmatprep.mubr.bf16.mxu0 0
      %1171 = vmatmul.mubr.bf16.gmra.mxu0 %v1076
      %v1172 = vpop.f32.mrf.mxu0
      %v1173 = vadd.f32 %v860, %v1172
      %v1174 = vpop.f32.mrf.mxu0
      %v1175 = vpop.f32.mrf.mxu0
      %v1176 = vadd.f32 %v863, %v1175
      %v1177 = vpop.f32.mrf.mxu0
      %1178 = vmatprep.mubr.bf16.mxu0 0
      %1179 = vmatmul.mubr.bf16.gmra.mxu0 %v1079
      %v1180 = vpop.f32.mrf.mxu0
      %v1181 = vadd.f32 %v868, %v1180
      %v1182 = vpop.f32.mrf.mxu0
      %v1183 = vpop.f32.mrf.mxu0
      %v1184 = vadd.f32 %v871, %v1183
      %v1185 = vpop.f32.mrf.mxu0
      %1186 = vmatprep.mubr.bf16.mxu0 0
      %1187 = vmatmul.mubr.bf16.gmra.mxu0 %v1082
      %v1188 = vpop.f32.mrf.mxu0
      %v1189 = vadd.f32 %v876, %v1188
      %v1190 = vpop.f32.mrf.mxu0
      %v1191 = vpop.f32.mrf.mxu0
      %v1192 = vadd.f32 %v879, %v1191
      %v1193 = vpop.f32.mrf.mxu0
      %1194 = vmatprep.mubr.bf16.mxu0 0
      %1195 = vmatmul.mubr.bf16.gmra.mxu0 %v1085
      %v1196 = vpop.f32.mrf.mxu0
      %v1197 = vadd.f32 %v884, %v1196
      %v1198 = vpop.f32.mrf.mxu0
      %v1199 = vpop.f32.mrf.mxu0
      %v1200 = vadd.f32 %v887, %v1199
      %v1201 = vpop.f32.mrf.mxu0
      %1202 = vmatprep.mubr.bf16.mxu0 0
      %1203 = vmatmul.mubr.bf16.gmra.mxu0 %v1088
      %v1204 = vpop.f32.mrf.mxu0
      %v1205 = vadd.f32 %v892, %v1204
      %v1206 = vpop.f32.mrf.mxu0
      %v1207 = vpop.f32.mrf.mxu0
      %v1208 = vadd.f32 %v895, %v1207
      %v1209 = vpop.f32.mrf.mxu0
      %1210 = vmatprep.mubr.bf16.mxu0 0
      %1211 = vmatmul.mubr.bf16.gmra.mxu0 %v1091
      %v1212 = vpop.f32.mrf.mxu0
      %v1213 = vadd.f32 %v900, %v1212
      %v1214 = vpop.f32.mrf.mxu0
      %v1215 = vpop.f32.mrf.mxu0
      %v1216 = vadd.f32 %v903, %v1215
      %v1217 = vpop.f32.mrf.mxu0
      %1218 = vmatprep.mubr.bf16.mxu0 0
      %1219 = vmatmul.mubr.bf16.gmra.mxu0 %v1094
      %v1220 = vpop.f32.mrf.mxu0
      %v1221 = vadd.f32 %v908, %v1220
      %v1222 = vpop.f32.mrf.mxu0
      %v1223 = vpop.f32.mrf.mxu0
      %v1224 = vadd.f32 %v911, %v1223
      %v1225 = vpop.f32.mrf.mxu0
      %1226 = vmatprep.mubr.bf16.mxu0 0
      %1227 = vmatmul.mubr.bf16.gmra.mxu0 %v1097
      %v1228 = vpop.f32.mrf.mxu0
      %v1229 = vadd.f32 %v916, %v1228
      %v1230 = vpop.f32.mrf.mxu0
      %v1231 = vpop.f32.mrf.mxu0
      %v1232 = vadd.f32 %v919, %v1231
      %v1233 = vpop.f32.mrf.mxu0
      %1234 = vmatprep.mubr.bf16.mxu0 0
      %1235 = vmatmul.mubr.bf16.gmra.mxu0 %v1100
      %v1236 = vpop.f32.mrf.mxu0
      %v1237 = vadd.f32 %v924, %v1236
      %v1238 = vpop.f32.mrf.mxu0
      %v1239 = vpop.f32.mrf.mxu0
      %v1240 = vadd.f32 %v927, %v1239
      %v1241 = vpop.f32.mrf.mxu0
      %1242 = vmatprep.mubr.bf16.mxu0 0
      %1243 = vmatmul.mubr.bf16.gmra.mxu0 %v1103
      %v1244 = vpop.f32.mrf.mxu0
      %v1245 = vadd.f32 %v932, %v1244
      %v1246 = vpop.f32.mrf.mxu0
      %v1247 = vpop.f32.mrf.mxu0
      %v1248 = vadd.f32 %v935, %v1247
      %v1249 = vpop.f32.mrf.mxu0
      %1250 = vmatprep.mubr.bf16.mxu0 0
      %1251 = vmatmul.mubr.bf16.gmra.mxu0 %v1106
      %v1252 = vpop.f32.mrf.mxu0
      %v1253 = vadd.f32 %v940, %v1252
      %v1254 = vpop.f32.mrf.mxu0
      %v1255 = vpop.f32.mrf.mxu0
      %v1256 = vadd.f32 %v943, %v1255
      %v1257 = vpop.f32.mrf.mxu0
      %1258 = vmatprep.mubr.bf16.mxu0 0
      %1259 = vmatmul.mubr.bf16.gmra.mxu0 %v1109
      %v1260 = vpop.f32.mrf.mxu0
      %v1261 = vadd.f32 %v948, %v1260
      %v1262 = vpop.f32.mrf.mxu0
      %v1263 = vpop.f32.mrf.mxu0
      %v1264 = vadd.f32 %v951, %v1263
      %v1265 = vpop.f32.mrf.mxu0
      %1266 = vmatprep.mubr.bf16.mxu0 0
      %1267 = vmatmul.mubr.bf16.gmra.mxu0 %v1112
      %v1268 = vpop.f32.mrf.mxu0
      %v1269 = vadd.f32 %v956, %v1268
      %v1270 = vpop.f32.mrf.mxu0
      %v1271 = vpop.f32.mrf.mxu0
      %v1272 = vadd.f32 %v959, %v1271
      %v1273 = vpop.f32.mrf.mxu0
      %1274 = vdwg.mxu0
      %s1275 = sadd.s32 %s224, 1
      %s1276 = smul.u32 %s1275, 3
      %s1277 = smul.addr %s1276, 4
      %s1278 = scalar_lea.vmem %s211, %s1277
      %v1279 = vld [vmem:[%s1278] sm:$0xf]
      %v1280 = vld [vmem:[%s1278 + $0x4] sm:$0xf]
      %v1281 = vld [vmem:[%s1278 + $0xc] sm:$0xf]
      %v1282 = vld [vmem:[%s1278 + $0x10] sm:$0xf]
      %v1283 = vld [vmem:[%s1278 + $0x18] sm:$0xf]
      %v1284 = vld [vmem:[%s1278 + $0x1c] sm:$0xf]
      %v1285 = vld [vmem:[%s1278 + $0x24] sm:$0xf]
      %v1286 = vld [vmem:[%s1278 + $0x28] sm:$0xf]
      %v1287 = vld [vmem:[%s1278 + $0x30] sm:$0xf]
      %v1288 = vld [vmem:[%s1278 + $0x34] sm:$0xf]
      %v1289 = vld [vmem:[%s1278 + $0x3c] sm:$0xf]
      %v1290 = vld [vmem:[%s1278 + $0x40] sm:$0xf]
      %v1291 = vld [vmem:[%s1278 + $0x48] sm:$0xf]
      %v1292 = vld [vmem:[%s1278 + $0x4c] sm:$0xf]
      %v1293 = vld [vmem:[%s1278 + $0x54] sm:$0xf]
      %v1294 = vld [vmem:[%s1278 + $0x58] sm:$0xf]
      %v1295 = vld [vmem:[%s1278 + $0x60] sm:$0xf]
      %v1296 = vld [vmem:[%s1278 + $0x64] sm:$0xf]
      %v1297 = vld [vmem:[%s1278 + $0x6c] sm:$0xf]
      %v1298 = vld [vmem:[%s1278 + $0x70] sm:$0xf]
      %v1299 = vld [vmem:[%s1278 + $0x78] sm:$0xf]
      %v1300 = vld [vmem:[%s1278 + $0x7c] sm:$0xf]
      %v1301 = vld [vmem:[%s1278 + $0x84] sm:$0xf]
      %v1302 = vld [vmem:[%s1278 + $0x88] sm:$0xf]
      %v1303 = vld [vmem:[%s1278 + $0x90] sm:$0xf]
      %v1304 = vld [vmem:[%s1278 + $0x94] sm:$0xf]
      %v1305 = vld [vmem:[%s1278 + $0x9c] sm:$0xf]
      %v1306 = vld [vmem:[%s1278 + $0xa0] sm:$0xf]
      %v1307 = vld [vmem:[%s1278 + $0xa8] sm:$0xf]
      %v1308 = vld [vmem:[%s1278 + $0xac] sm:$0xf]
      %v1309 = vld [vmem:[%s1278 + $0xb4] sm:$0xf]
      %v1310 = vld [vmem:[%s1278 + $0xb8] sm:$0xf]
      %s1311 = scalar_lea.vmem %s1, 64
      %v1312 = vld [vmem:[%s1311] sm:$0xf]
      %v1313 = vld [vmem:[%s1311 + $0x4] sm:$0xf]
      %v1314 = vld [vmem:[%s1311 + $0x8] sm:$0xf]
      %v1315 = vld [vmem:[%s1311 + $0xc] sm:$0xf]
      %v1316 = vld [vmem:[%s1311 + $0x10] sm:$0xf]
      %v1317 = vld [vmem:[%s1311 + $0x14] sm:$0xf]
      %v1318 = vld [vmem:[%s1311 + $0x18] sm:$0xf]
      %v1319 = vld [vmem:[%s1311 + $0x1c] sm:$0xf]
      %v1352 = vunpack.c.l.b16 %v1279
      %v1353 = vunpack.c.l.b16 %v1280
      %v1354 = vunpack.c.l.b16 %v1281
      %v1355 = vunpack.c.l.b16 %v1282
      %v1356 = vunpack.c.l.b16 %v1283
      %v1357 = vunpack.c.l.b16 %v1284
      %v1358 = vunpack.c.l.b16 %v1285
      %v1359 = vunpack.c.l.b16 %v1286
      %v1360 = vunpack.c.l.b16 %v1287
      %v1361 = vunpack.c.l.b16 %v1288
      %v1362 = vunpack.c.l.b16 %v1289
      %v1363 = vunpack.c.l.b16 %v1290
      %v1364 = vunpack.c.l.b16 %v1291
      %v1365 = vunpack.c.l.b16 %v1292
      %v1366 = vunpack.c.l.b16 %v1293
      %v1367 = vunpack.c.l.b16 %v1294
      %v1368 = vunpack.c.l.b16 %v1295
      %v1369 = vunpack.c.l.b16 %v1296
      %v1370 = vunpack.c.l.b16 %v1297
      %v1371 = vunpack.c.l.b16 %v1298
      %v1372 = vunpack.c.l.b16 %v1299
      %v1373 = vunpack.c.l.b16 %v1300
      %v1374 = vunpack.c.l.b16 %v1301
      %v1375 = vunpack.c.l.b16 %v1302
      %v1376 = vunpack.c.l.b16 %v1303
      %v1377 = vunpack.c.l.b16 %v1304
      %v1378 = vunpack.c.l.b16 %v1305
      %v1379 = vunpack.c.l.b16 %v1306
      %v1380 = vunpack.c.l.b16 %v1307
      %v1381 = vunpack.c.l.b16 %v1308
      %v1382 = vunpack.c.l.b16 %v1309
      %v1383 = vunpack.c.l.b16 %v1310
      %v1384 = vpack.c.b16 %v1353, %v1352
      %v1385 = vpack.c.b16 %v1355, %v1354
      %v1386 = vpack.c.b16 %v1357, %v1356
      %v1387 = vpack.c.b16 %v1359, %v1358
      %v1388 = vpack.c.b16 %v1361, %v1360
      %v1389 = vpack.c.b16 %v1363, %v1362
      %v1390 = vpack.c.b16 %v1365, %v1364
      %v1391 = vpack.c.b16 %v1367, %v1366
      %v1392 = vpack.c.b16 %v1369, %v1368
      %v1393 = vpack.c.b16 %v1371, %v1370
      %v1394 = vpack.c.b16 %v1373, %v1372
      %v1395 = vpack.c.b16 %v1375, %v1374
      %v1396 = vpack.c.b16 %v1377, %v1376
      %v1397 = vpack.c.b16 %v1379, %v1378
      %v1398 = vpack.c.b16 %v1381, %v1380
      %v1399 = vpack.c.b16 %v1383, %v1382
      %v1408 = vunpack.c.l.b16 %v1312
      %v1409 = vunpack.c.l.b16 %v1313
      %v1410 = vunpack.c.l.b16 %v1314
      %v1411 = vunpack.c.l.b16 %v1315
      %v1412 = vunpack.c.l.b16 %v1316
      %v1413 = vunpack.c.l.b16 %v1317
      %v1414 = vunpack.c.l.b16 %v1318
      %v1415 = vunpack.c.l.b16 %v1319
      %v1416 = vpack.c.b16 %v1409, %v1408
      %v1417 = vpack.c.b16 %v1411, %v1410
      %v1418 = vpack.c.b16 %v1413, %v1412
      %v1419 = vpack.c.b16 %v1415, %v1414
      %v1425 = vsel %vm752, %v1384, 0
      %v1428 = vsel %vm752, %v1385, 0
      %v1431 = vsel %vm752, %v1386, 0
      %v1434 = vsel %vm752, %v1387, 0
      %v1437 = vsel %vm752, %v1388, 0
      %v1440 = vsel %vm752, %v1389, 0
      %v1443 = vsel %vm752, %v1390, 0
      %v1446 = vsel %vm752, %v1391, 0
      %v1449 = vsel %vm752, %v1392, 0
      %v1452 = vsel %vm752, %v1393, 0
      %v1455 = vsel %vm752, %v1394, 0
      %v1458 = vsel %vm752, %v1395, 0
      %v1461 = vsel %vm752, %v1396, 0
      %v1464 = vsel %vm752, %v1397, 0
      %v1467 = vsel %vm752, %v1398, 0
      %v1470 = vsel %vm752, %v1399, 0
      %1472 = vmatprep.subr.bf16.mxu0 0
      %1473 = vmatpush1.bf16.msra.mxu0 0
      %1474 = vmatprep.subr.bf16.mxu0 0
      %1475 = vmatpush1.bf16.msra.mxu0 0
      %1476 = vmatprep.subr.bf16.mxu0 0
      %1477 = vmatpush1.bf16.msra.mxu0 0
      %1478 = vmatprep.subr.bf16.mxu0 0
      %1479 = vmatpush1.bf16.msra.mxu0 0
      %1480 = vmatprep.subr.bf16.mxu0 0
      %1481 = vmatpush1.bf16.msra.mxu0 %v1419
      %1482 = vmatprep.subr.bf16.mxu0 0
      %1483 = vmatpush1.bf16.msra.mxu0 %v1418
      %1484 = vmatprep.subr.bf16.mxu0 0
      %1485 = vmatpush1.bf16.msra.mxu0 %v1417
      %1486 = vmatprep.subr.bf16.mxu0 0
      %1487 = vmatpush1.bf16.msra.mxu0 %v1416
      %1488 = vmatprep.subr.bf16.mxu0 0
      %1489 = vmatpush2.bf16.msra.mxu0 0
      %1490 = vmatprep.subr.bf16.mxu0 0
      %1491 = vmatpush2.bf16.msra.mxu0 0
      %1492 = vmatprep.subr.bf16.mxu0 0
      %1493 = vmatpush2.bf16.msra.mxu0 0
      %1494 = vmatprep.subr.bf16.mxu0 0
      %1495 = vmatpush2.bf16.msra.mxu0 0
      %1496 = vmatprep.subr.bf16.mxu0 0
      %1497 = vmatpush2.bf16.msra.mxu0 0
      %1498 = vmatprep.subr.bf16.mxu0 0
      %1499 = vmatpush2.bf16.msra.mxu0 0
      %1500 = vmatprep.subr.bf16.mxu0 0
      %1501 = vmatpush2.bf16.msra.mxu0 0
      %1502 = vmatprep.subr.bf16.mxu0 0
      %1503 = vmatpush2.bf16.msra.mxu0 0
      %1504 = vmatprep.mubr.bf16.mxu0 0
      %1505 = vmatmul.mubr.bf16.gmra.mxu0 %v1425
      %v1506 = vpop.f32.mrf.mxu0
      %v1507 = vadd.f32 0.0, %v1506
      %v1508 = vpop.f32.mrf.mxu0
      %v1509 = vpop.f32.mrf.mxu0
      %v1510 = vadd.f32 0.0, %v1509
      %v1511 = vpop.f32.mrf.mxu0
      %1512 = vmatprep.mubr.bf16.mxu0 0
      %1513 = vmatmul.mubr.bf16.gmra.mxu0 %v1428
      %v1514 = vpop.f32.mrf.mxu0
      %v1515 = vadd.f32 0.0, %v1514
      %v1516 = vpop.f32.mrf.mxu0
      %v1517 = vpop.f32.mrf.mxu0
      %v1518 = vadd.f32 0.0, %v1517
      %v1519 = vpop.f32.mrf.mxu0
      %1520 = vmatprep.mubr.bf16.mxu0 0
      %1521 = vmatmul.mubr.bf16.gmra.mxu0 %v1431
      %v1522 = vpop.f32.mrf.mxu0
      %v1523 = vadd.f32 0.0, %v1522
      %v1524 = vpop.f32.mrf.mxu0
      %v1525 = vpop.f32.mrf.mxu0
      %v1526 = vadd.f32 0.0, %v1525
      %v1527 = vpop.f32.mrf.mxu0
      %1528 = vmatprep.mubr.bf16.mxu0 0
      %1529 = vmatmul.mubr.bf16.gmra.mxu0 %v1434
      %v1530 = vpop.f32.mrf.mxu0
      %v1531 = vadd.f32 0.0, %v1530
      %v1532 = vpop.f32.mrf.mxu0
      %v1533 = vpop.f32.mrf.mxu0
      %v1534 = vadd.f32 0.0, %v1533
      %v1535 = vpop.f32.mrf.mxu0
      %1536 = vmatprep.mubr.bf16.mxu0 0
      %1537 = vmatmul.mubr.bf16.gmra.mxu0 %v1437
      %v1538 = vpop.f32.mrf.mxu0
      %v1539 = vadd.f32 0.0, %v1538
      %v1540 = vpop.f32.mrf.mxu0
      %v1541 = vpop.f32.mrf.mxu0
      %v1542 = vadd.f32 0.0, %v1541
      %v1543 = vpop.f32.mrf.mxu0
      %1544 = vmatprep.mubr.bf16.mxu0 0
      %1545 = vmatmul.mubr.bf16.gmra.mxu0 %v1440
      %v1546 = vpop.f32.mrf.mxu0
      %v1547 = vadd.f32 0.0, %v1546
      %v1548 = vpop.f32.mrf.mxu0
      %v1549 = vpop.f32.mrf.mxu0
      %v1550 = vadd.f32 0.0, %v1549
      %v1551 = vpop.f32.mrf.mxu0
      %1552 = vmatprep.mubr.bf16.mxu0 0
      %1553 = vmatmul.mubr.bf16.gmra.mxu0 %v1443
      %v1554 = vpop.f32.mrf.mxu0
      %v1555 = vadd.f32 0.0, %v1554
      %v1556 = vpop.f32.mrf.mxu0
      %v1557 = vpop.f32.mrf.mxu0
      %v1558 = vadd.f32 0.0, %v1557
      %v1559 = vpop.f32.mrf.mxu0
      %1560 = vmatprep.mubr.bf16.mxu0 0
      %1561 = vmatmul.mubr.bf16.gmra.mxu0 %v1446
      %v1562 = vpop.f32.mrf.mxu0
      %v1563 = vadd.f32 0.0, %v1562
      %v1564 = vpop.f32.mrf.mxu0
      %v1565 = vpop.f32.mrf.mxu0
      %v1566 = vadd.f32 0.0, %v1565
      %v1567 = vpop.f32.mrf.mxu0
      %1568 = vmatprep.mubr.bf16.mxu0 0
      %1569 = vmatmul.mubr.bf16.gmra.mxu0 %v1449
      %v1570 = vpop.f32.mrf.mxu0
      %v1571 = vadd.f32 0.0, %v1570
      %v1572 = vpop.f32.mrf.mxu0
      %v1573 = vpop.f32.mrf.mxu0
      %v1574 = vadd.f32 0.0, %v1573
      %v1575 = vpop.f32.mrf.mxu0
      %1576 = vmatprep.mubr.bf16.mxu0 0
      %1577 = vmatmul.mubr.bf16.gmra.mxu0 %v1452
      %v1578 = vpop.f32.mrf.mxu0
      %v1579 = vadd.f32 0.0, %v1578
      %v1580 = vpop.f32.mrf.mxu0
      %v1581 = vpop.f32.mrf.mxu0
      %v1582 = vadd.f32 0.0, %v1581
      %v1583 = vpop.f32.mrf.mxu0
      %1584 = vmatprep.mubr.bf16.mxu0 0
      %1585 = vmatmul.mubr.bf16.gmra.mxu0 %v1455
      %v1586 = vpop.f32.mrf.mxu0
      %v1587 = vadd.f32 0.0, %v1586
      %v1588 = vpop.f32.mrf.mxu0
      %v1589 = vpop.f32.mrf.mxu0
      %v1590 = vadd.f32 0.0, %v1589
      %v1591 = vpop.f32.mrf.mxu0
      %1592 = vmatprep.mubr.bf16.mxu0 0
      %1593 = vmatmul.mubr.bf16.gmra.mxu0 %v1458
      %v1594 = vpop.f32.mrf.mxu0
      %v1595 = vadd.f32 0.0, %v1594
      %v1596 = vpop.f32.mrf.mxu0
      %v1597 = vpop.f32.mrf.mxu0
      %v1598 = vadd.f32 0.0, %v1597
      %v1599 = vpop.f32.mrf.mxu0
      %1600 = vmatprep.mubr.bf16.mxu0 0
      %1601 = vmatmul.mubr.bf16.gmra.mxu0 %v1461
      %v1602 = vpop.f32.mrf.mxu0
      %v1603 = vadd.f32 0.0, %v1602
      %v1604 = vpop.f32.mrf.mxu0
      %v1605 = vpop.f32.mrf.mxu0
      %v1606 = vadd.f32 0.0, %v1605
      %v1607 = vpop.f32.mrf.mxu0
      %1608 = vmatprep.mubr.bf16.mxu0 0
      %1609 = vmatmul.mubr.bf16.gmra.mxu0 %v1464
      %v1610 = vpop.f32.mrf.mxu0
      %v1611 = vadd.f32 0.0, %v1610
      %v1612 = vpop.f32.mrf.mxu0
      %v1613 = vpop.f32.mrf.mxu0
      %v1614 = vadd.f32 0.0, %v1613
      %v1615 = vpop.f32.mrf.mxu0
      %1616 = vmatprep.mubr.bf16.mxu0 0
      %1617 = vmatmul.mubr.bf16.gmra.mxu0 %v1467
      %v1618 = vpop.f32.mrf.mxu0
      %v1619 = vadd.f32 0.0, %v1618
      %v1620 = vpop.f32.mrf.mxu0
      %v1621 = vpop.f32.mrf.mxu0
      %v1622 = vadd.f32 0.0, %v1621
      %v1623 = vpop.f32.mrf.mxu0
      %1624 = vmatprep.mubr.bf16.mxu0 0
      %1625 = vmatmul.mubr.bf16.gmra.mxu0 %v1470
      %v1626 = vpop.f32.mrf.mxu0
      %v1627 = vadd.f32 0.0, %v1626
      %v1628 = vpop.f32.mrf.mxu0
      %v1629 = vpop.f32.mrf.mxu0
      %v1630 = vadd.f32 0.0, %v1629
      %v1631 = vpop.f32.mrf.mxu0
      %1632 = vdwg.mxu0
      %v1633 = vadd.f32 %v1149, %v1507
      %v1634 = vadd.f32 %v1152, %v1510
      %v1635 = vadd.f32 %v1157, %v1515
      %v1636 = vadd.f32 %v1160, %v1518
      %v1637 = vadd.f32 %v1165, %v1523
      %v1638 = vadd.f32 %v1168, %v1526
      %v1639 = vadd.f32 %v1173, %v1531
      %v1640 = vadd.f32 %v1176, %v1534
      %v1641 = vadd.f32 %v1181, %v1539
      %v1642 = vadd.f32 %v1184, %v1542
      %v1643 = vadd.f32 %v1189, %v1547
      %v1644 = vadd.f32 %v1192, %v1550
      %v1645 = vadd.f32 %v1197, %v1555
      %v1646 = vadd.f32 %v1200, %v1558
      %v1647 = vadd.f32 %v1205, %v1563
      %v1648 = vadd.f32 %v1208, %v1566
      %v1649 = vadd.f32 %v1213, %v1571
      %v1650 = vadd.f32 %v1216, %v1574
      %v1651 = vadd.f32 %v1221, %v1579
      %v1652 = vadd.f32 %v1224, %v1582
      %v1653 = vadd.f32 %v1229, %v1587
      %v1654 = vadd.f32 %v1232, %v1590
      %v1655 = vadd.f32 %v1237, %v1595
      %v1656 = vadd.f32 %v1240, %v1598
      %v1657 = vadd.f32 %v1245, %v1603
      %v1658 = vadd.f32 %v1248, %v1606
      %v1659 = vadd.f32 %v1253, %v1611
      %v1660 = vadd.f32 %v1256, %v1614
      %v1661 = vadd.f32 %v1261, %v1619
      %v1662 = vadd.f32 %v1264, %v1622
      %v1663 = vadd.f32 %v1269, %v1627
      %v1664 = vadd.f32 %v1272, %v1630
      %v1665 = vld [vmem:[%s1278] sm:$0xf]
      %v1666 = vld [vmem:[%s1278 + $0x4] sm:$0xf]
      %v1667 = vld [vmem:[%s1278 + $0x8] sm:$0x1]
      %v1668 = vld [vmem:[%s1278 + $0xc] sm:$0xf]
      %v1669 = vld [vmem:[%s1278 + $0x10] sm:$0xf]
      %v1670 = vld [vmem:[%s1278 + $0x14] sm:$0x1]
      %v1671 = vld [vmem:[%s1278 + $0x18] sm:$0xf]
      %v1672 = vld [vmem:[%s1278 + $0x1c] sm:$0xf]
      %v1673 = vld [vmem:[%s1278 + $0x20] sm:$0x1]
      %v1674 = vld [vmem:[%s1278 + $0x24] sm:$0xf]
      %v1675 = vld [vmem:[%s1278 + $0x28] sm:$0xf]
      %v1676 = vld [vmem:[%s1278 + $0x2c] sm:$0x1]
      %v1677 = vld [vmem:[%s1278 + $0x30] sm:$0xf]
      %v1678 = vld [vmem:[%s1278 + $0x34] sm:$0xf]
      %v1679 = vld [vmem:[%s1278 + $0x38] sm:$0x1]
      %v1680 = vld [vmem:[%s1278 + $0x3c] sm:$0xf]
      %v1681 = vld [vmem:[%s1278 + $0x40] sm:$0xf]
      %v1682 = vld [vmem:[%s1278 + $0x44] sm:$0x1]
      %v1683 = vld [vmem:[%s1278 + $0x48] sm:$0xf]
      %v1684 = vld [vmem:[%s1278 + $0x4c] sm:$0xf]
      %v1685 = vld [vmem:[%s1278 + $0x50] sm:$0x1]
      %v1686 = vld [vmem:[%s1278 + $0x54] sm:$0xf]
      %v1687 = vld [vmem:[%s1278 + $0x58] sm:$0xf]
      %v1688 = vld [vmem:[%s1278 + $0x5c] sm:$0x1]
      %v1689 = vld [vmem:[%s1278 + $0x60] sm:$0xf]
      %v1690 = vld [vmem:[%s1278 + $0x64] sm:$0xf]
      %v1691 = vld [vmem:[%s1278 + $0x68] sm:$0x1]
      %v1692 = vld [vmem:[%s1278 + $0x6c] sm:$0xf]
      %v1693 = vld [vmem:[%s1278 + $0x70] sm:$0xf]
      %v1694 = vld [vmem:[%s1278 + $0x74] sm:$0x1]
      %v1695 = vld [vmem:[%s1278 + $0x78] sm:$0xf]
      %v1696 = vld [vmem:[%s1278 + $0x7c] sm:$0xf]
      %v1697 = vld [vmem:[%s1278 + $0x80] sm:$0x1]
      %v1698 = vld [vmem:[%s1278 + $0x84] sm:$0xf]
      %v1699 = vld [vmem:[%s1278 + $0x88] sm:$0xf]
      %v1700 = vld [vmem:[%s1278 + $0x8c] sm:$0x1]
      %v1701 = vld [vmem:[%s1278 + $0x90] sm:$0xf]
      %v1702 = vld [vmem:[%s1278 + $0x94] sm:$0xf]
      %v1703 = vld [vmem:[%s1278 + $0x98] sm:$0x1]
      %v1704 = vld [vmem:[%s1278 + $0x9c] sm:$0xf]
      %v1705 = vld [vmem:[%s1278 + $0xa0] sm:$0xf]
      %v1706 = vld [vmem:[%s1278 + $0xa4] sm:$0x1]
      %v1707 = vld [vmem:[%s1278 + $0xa8] sm:$0xf]
      %v1708 = vld [vmem:[%s1278 + $0xac] sm:$0xf]
      %v1709 = vld [vmem:[%s1278 + $0xb0] sm:$0x1]
      %v1710 = vld [vmem:[%s1278 + $0xb4] sm:$0xf]
      %v1711 = vld [vmem:[%s1278 + $0xb8] sm:$0xf]
      %v1712 = vld [vmem:[%s1278 + $0xbc] sm:$0x1]
      %v1714 = vshrl.u32 %v1665, 16
      %v1716 = vrot.slane %v1714, 4
      %v1717 = vshll.u32 %v1665, 16
      %v1719 = vrot.slane %v1717, 5
      %v1720 = vor.u32 %v1716, %v1719
      %v1721 = vrot.slane %v1720, 4
      %v1723 = vshll.u32 %v1666, 16
      %v1725 = vrot.slane %v1723, 5
      %v1726 = vsel %vm286, %v1721, %v1725
      %v1727 = vshrl.u32 %v1666, 16
      %v1729 = vrot.slane %v1727, 4
      %v1730 = vor.u32 %v1729, %v1725
      %v1731 = vrot.slane %v1730, 4
      %v1733 = vshll.u32 %v1667, 16
      %v1735 = vrot.slane %v1733, 5
      %v1736 = vsel %vm286, %v1731, %v1735
      %v1738 = vshrl.u32 %v1668, 16
      %v1740 = vrot.slane %v1738, 4
      %v1741 = vshll.u32 %v1668, 16
      %v1743 = vrot.slane %v1741, 5
      %v1744 = vor.u32 %v1740, %v1743
      %v1745 = vrot.slane %v1744, 4
      %v1747 = vshll.u32 %v1669, 16
      %v1749 = vrot.slane %v1747, 5
      %v1750 = vsel %vm286, %v1745, %v1749
      %v1751 = vshrl.u32 %v1669, 16
      %v1753 = vrot.slane %v1751, 4
      %v1754 = vor.u32 %v1753, %v1749
      %v1755 = vrot.slane %v1754, 4
      %v1757 = vshll.u32 %v1670, 16
      %v1759 = vrot.slane %v1757, 5
      %v1760 = vsel %vm286, %v1755, %v1759
      %v1762 = vshrl.u32 %v1671, 16
      %v1764 = vrot.slane %v1762, 4
      %v1765 = vshll.u32 %v1671, 16
      %v1767 = vrot.slane %v1765, 5
      %v1768 = vor.u32 %v1764, %v1767
      %v1769 = vrot.slane %v1768, 4
      %v1771 = vshll.u32 %v1672, 16
      %v1773 = vrot.slane %v1771, 5
      %v1774 = vsel %vm286, %v1769, %v1773
      %v1775 = vshrl.u32 %v1672, 16
      %v1777 = vrot.slane %v1775, 4
      %v1778 = vor.u32 %v1777, %v1773
      %v1779 = vrot.slane %v1778, 4
      %v1781 = vshll.u32 %v1673, 16
      %v1783 = vrot.slane %v1781, 5
      %v1784 = vsel %vm286, %v1779, %v1783
      %v1786 = vshrl.u32 %v1674, 16
      %v1788 = vrot.slane %v1786, 4
      %v1789 = vshll.u32 %v1674, 16
      %v1791 = vrot.slane %v1789, 5
      %v1792 = vor.u32 %v1788, %v1791
      %v1793 = vrot.slane %v1792, 4
      %v1795 = vshll.u32 %v1675, 16
      %v1797 = vrot.slane %v1795, 5
      %v1798 = vsel %vm286, %v1793, %v1797
      %v1799 = vshrl.u32 %v1675, 16
      %v1801 = vrot.slane %v1799, 4
      %v1802 = vor.u32 %v1801, %v1797
      %v1803 = vrot.slane %v1802, 4
      %v1805 = vshll.u32 %v1676, 16
      %v1807 = vrot.slane %v1805, 5
      %v1808 = vsel %vm286, %v1803, %v1807
      %v1810 = vshrl.u32 %v1677, 16
      %v1812 = vrot.slane %v1810, 4
      %v1813 = vshll.u32 %v1677, 16
      %v1815 = vrot.slane %v1813, 5
      %v1816 = vor.u32 %v1812, %v1815
      %v1817 = vrot.slane %v1816, 4
      %v1819 = vshll.u32 %v1678, 16
      %v1821 = vrot.slane %v1819, 5
      %v1822 = vsel %vm286, %v1817, %v1821
      %v1823 = vshrl.u32 %v1678, 16
      %v1825 = vrot.slane %v1823, 4
      %v1826 = vor.u32 %v1825, %v1821
      %v1827 = vrot.slane %v1826, 4
      %v1829 = vshll.u32 %v1679, 16
      %v1831 = vrot.slane %v1829, 5
      %v1832 = vsel %vm286, %v1827, %v1831
      %v1834 = vshrl.u32 %v1680, 16
      %v1836 = vrot.slane %v1834, 4
      %v1837 = vshll.u32 %v1680, 16
      %v1839 = vrot.slane %v1837, 5
      %v1840 = vor.u32 %v1836, %v1839
      %v1841 = vrot.slane %v1840, 4
      %v1843 = vshll.u32 %v1681, 16
      %v1845 = vrot.slane %v1843, 5
      %v1846 = vsel %vm286, %v1841, %v1845
      %v1847 = vshrl.u32 %v1681, 16
      %v1849 = vrot.slane %v1847, 4
      %v1850 = vor.u32 %v1849, %v1845
      %v1851 = vrot.slane %v1850, 4
      %v1853 = vshll.u32 %v1682, 16
      %v1855 = vrot.slane %v1853, 5
      %v1856 = vsel %vm286, %v1851, %v1855
      %v1858 = vshrl.u32 %v1683, 16
      %v1860 = vrot.slane %v1858, 4
      %v1861 = vshll.u32 %v1683, 16
      %v1863 = vrot.slane %v1861, 5
      %v1864 = vor.u32 %v1860, %v1863
      %v1865 = vrot.slane %v1864, 4
      %v1867 = vshll.u32 %v1684, 16
      %v1869 = vrot.slane %v1867, 5
      %v1870 = vsel %vm286, %v1865, %v1869
      %v1871 = vshrl.u32 %v1684, 16
      %v1873 = vrot.slane %v1871, 4
      %v1874 = vor.u32 %v1873, %v1869
      %v1875 = vrot.slane %v1874, 4
      %v1877 = vshll.u32 %v1685, 16
      %v1879 = vrot.slane %v1877, 5
      %v1880 = vsel %vm286, %v1875, %v1879
      %v1882 = vshrl.u32 %v1686, 16
      %v1884 = vrot.slane %v1882, 4
      %v1885 = vshll.u32 %v1686, 16
      %v1887 = vrot.slane %v1885, 5
      %v1888 = vor.u32 %v1884, %v1887
      %v1889 = vrot.slane %v1888, 4
      %v1891 = vshll.u32 %v1687, 16
      %v1893 = vrot.slane %v1891, 5
      %v1894 = vsel %vm286, %v1889, %v1893
      %v1895 = vshrl.u32 %v1687, 16
      %v1897 = vrot.slane %v1895, 4
      %v1898 = vor.u32 %v1897, %v1893
      %v1899 = vrot.slane %v1898, 4
      %v1901 = vshll.u32 %v1688, 16
      %v1903 = vrot.slane %v1901, 5
      %v1904 = vsel %vm286, %v1899, %v1903
      %v1906 = vshrl.u32 %v1689, 16
      %v1908 = vrot.slane %v1906, 4
      %v1909 = vshll.u32 %v1689, 16
      %v1911 = vrot.slane %v1909, 5
      %v1912 = vor.u32 %v1908, %v1911
      %v1913 = vrot.slane %v1912, 4
      %v1915 = vshll.u32 %v1690, 16
      %v1917 = vrot.slane %v1915, 5
      %v1918 = vsel %vm286, %v1913, %v1917
      %v1919 = vshrl.u32 %v1690, 16
      %v1921 = vrot.slane %v1919, 4
      %v1922 = vor.u32 %v1921, %v1917
      %v1923 = vrot.slane %v1922, 4
      %v1925 = vshll.u32 %v1691, 16
      %v1927 = vrot.slane %v1925, 5
      %v1928 = vsel %vm286, %v1923, %v1927
      %v1930 = vshrl.u32 %v1692, 16
      %v1932 = vrot.slane %v1930, 4
      %v1933 = vshll.u32 %v1692, 16
      %v1935 = vrot.slane %v1933, 5
      %v1936 = vor.u32 %v1932, %v1935
      %v1937 = vrot.slane %v1936, 4
      %v1939 = vshll.u32 %v1693, 16
      %v1941 = vrot.slane %v1939, 5
      %v1942 = vsel %vm286, %v1937, %v1941
      %v1943 = vshrl.u32 %v1693, 16
      %v1945 = vrot.slane %v1943, 4
      %v1946 = vor.u32 %v1945, %v1941
      %v1947 = vrot.slane %v1946, 4
      %v1949 = vshll.u32 %v1694, 16
      %v1951 = vrot.slane %v1949, 5
      %v1952 = vsel %vm286, %v1947, %v1951
      %v1954 = vshrl.u32 %v1695, 16
      %v1956 = vrot.slane %v1954, 4
      %v1957 = vshll.u32 %v1695, 16
      %v1959 = vrot.slane %v1957, 5
      %v1960 = vor.u32 %v1956, %v1959
      %v1961 = vrot.slane %v1960, 4
      %v1963 = vshll.u32 %v1696, 16
      %v1965 = vrot.slane %v1963, 5
      %v1966 = vsel %vm286, %v1961, %v1965
      %v1967 = vshrl.u32 %v1696, 16
      %v1969 = vrot.slane %v1967, 4
      %v1970 = vor.u32 %v1969, %v1965
      %v1971 = vrot.slane %v1970, 4
      %v1973 = vshll.u32 %v1697, 16
      %v1975 = vrot.slane %v1973, 5
      %v1976 = vsel %vm286, %v1971, %v1975
      %v1978 = vshrl.u32 %v1698, 16
      %v1980 = vrot.slane %v1978, 4
      %v1981 = vshll.u32 %v1698, 16
      %v1983 = vrot.slane %v1981, 5
      %v1984 = vor.u32 %v1980, %v1983
      %v1985 = vrot.slane %v1984, 4
      %v1987 = vshll.u32 %v1699, 16
      %v1989 = vrot.slane %v1987, 5
      %v1990 = vsel %vm286, %v1985, %v1989
      %v1991 = vshrl.u32 %v1699, 16
      %v1993 = vrot.slane %v1991, 4
      %v1994 = vor.u32 %v1993, %v1989
      %v1995 = vrot.slane %v1994, 4
      %v1997 = vshll.u32 %v1700, 16
      %v1999 = vrot.slane %v1997, 5
      %v2000 = vsel %vm286, %v1995, %v1999
      %v2002 = vshrl.u32 %v1701, 16
      %v2004 = vrot.slane %v2002, 4
      %v2005 = vshll.u32 %v1701, 16
      %v2007 = vrot.slane %v2005, 5
      %v2008 = vor.u32 %v2004, %v2007
      %v2009 = vrot.slane %v2008, 4
      %v2011 = vshll.u32 %v1702, 16
      %v2013 = vrot.slane %v2011, 5
      %v2014 = vsel %vm286, %v2009, %v2013
      %v2015 = vshrl.u32 %v1702, 16
      %v2017 = vrot.slane %v2015, 4
      %v2018 = vor.u32 %v2017, %v2013
      %v2019 = vrot.slane %v2018, 4
      %v2021 = vshll.u32 %v1703, 16
      %v2023 = vrot.slane %v2021, 5
      %v2024 = vsel %vm286, %v2019, %v2023
      %v2026 = vshrl.u32 %v1704, 16
      %v2028 = vrot.slane %v2026, 4
      %v2029 = vshll.u32 %v1704, 16
      %v2031 = vrot.slane %v2029, 5
      %v2032 = vor.u32 %v2028, %v2031
      %v2033 = vrot.slane %v2032, 4
      %v2035 = vshll.u32 %v1705, 16
      %v2037 = vrot.slane %v2035, 5
      %v2038 = vsel %vm286, %v2033, %v2037
      %v2039 = vshrl.u32 %v1705, 16
      %v2041 = vrot.slane %v2039, 4
      %v2042 = vor.u32 %v2041, %v2037
      %v2043 = vrot.slane %v2042, 4
      %v2045 = vshll.u32 %v1706, 16
      %v2047 = vrot.slane %v2045, 5
      %v2048 = vsel %vm286, %v2043, %v2047
      %v2050 = vshrl.u32 %v1707, 16
      %v2052 = vrot.slane %v2050, 4
      %v2053 = vshll.u32 %v1707, 16
      %v2055 = vrot.slane %v2053, 5
      %v2056 = vor.u32 %v2052, %v2055
      %v2057 = vrot.slane %v2056, 4
      %v2059 = vshll.u32 %v1708, 16
      %v2061 = vrot.slane %v2059, 5
      %v2062 = vsel %vm286, %v2057, %v2061
      %v2063 = vshrl.u32 %v1708, 16
      %v2065 = vrot.slane %v2063, 4
      %v2066 = vor.u32 %v2065, %v2061
      %v2067 = vrot.slane %v2066, 4
      %v2069 = vshll.u32 %v1709, 16
      %v2071 = vrot.slane %v2069, 5
      %v2072 = vsel %vm286, %v2067, %v2071
      %v2074 = vshrl.u32 %v1710, 16
      %v2076 = vrot.slane %v2074, 4
      %v2077 = vshll.u32 %v1710, 16
      %v2079 = vrot.slane %v2077, 5
      %v2080 = vor.u32 %v2076, %v2079
      %v2081 = vrot.slane %v2080, 4
      %v2083 = vshll.u32 %v1711, 16
      %v2085 = vrot.slane %v2083, 5
      %v2086 = vsel %vm286, %v2081, %v2085
      %v2087 = vshrl.u32 %v1711, 16
      %v2089 = vrot.slane %v2087, 4
      %v2090 = vor.u32 %v2089, %v2085
      %v2091 = vrot.slane %v2090, 4
      %v2093 = vshll.u32 %v1712, 16
      %v2095 = vrot.slane %v2093, 5
      %v2096 = vsel %vm286, %v2091, %v2095
      %s2097 = scalar_lea.vmem %s1, 96
      %v2098 = vld [vmem:[%s2097] sm:$0xf]
      %v2099 = vld [vmem:[%s2097 + $0x4] sm:$0xf]
      %v2100 = vld [vmem:[%s2097 + $0x8] sm:$0xf]
      %v2101 = vld [vmem:[%s2097 + $0xc] sm:$0xf]
      %v2102 = vld [vmem:[%s2097 + $0x10] sm:$0xf]
      %v2103 = vld [vmem:[%s2097 + $0x14] sm:$0xf]
      %v2104 = vld [vmem:[%s2097 + $0x18] sm:$0xf]
      %v2105 = vld [vmem:[%s2097 + $0x1c] sm:$0xf]
      %v2106 = vunpack.c.l.b16 %v1726
      %v2107 = vunpack.c.l.b16 %v1736
      %v2108 = vunpack.c.l.b16 %v1750
      %v2109 = vunpack.c.l.b16 %v1760
      %v2110 = vunpack.c.l.b16 %v1774
      %v2111 = vunpack.c.l.b16 %v1784
      %v2112 = vunpack.c.l.b16 %v1798
      %v2113 = vunpack.c.l.b16 %v1808
      %v2114 = vunpack.c.l.b16 %v1822
      %v2115 = vunpack.c.l.b16 %v1832
      %v2116 = vunpack.c.l.b16 %v1846
      %v2117 = vunpack.c.l.b16 %v1856
      %v2118 = vunpack.c.l.b16 %v1870
      %v2119 = vunpack.c.l.b16 %v1880
      %v2120 = vunpack.c.l.b16 %v1894
      %v2121 = vunpack.c.l.b16 %v1904
      %v2122 = vunpack.c.l.b16 %v1918
      %v2123 = vunpack.c.l.b16 %v1928
      %v2124 = vunpack.c.l.b16 %v1942
      %v2125 = vunpack.c.l.b16 %v1952
      %v2126 = vunpack.c.l.b16 %v1966
      %v2127 = vunpack.c.l.b16 %v1976
      %v2128 = vunpack.c.l.b16 %v1990
      %v2129 = vunpack.c.l.b16 %v2000
      %v2130 = vunpack.c.l.b16 %v2014
      %v2131 = vunpack.c.l.b16 %v2024
      %v2132 = vunpack.c.l.b16 %v2038
      %v2133 = vunpack.c.l.b16 %v2048
      %v2134 = vunpack.c.l.b16 %v2062
      %v2135 = vunpack.c.l.b16 %v2072
      %v2136 = vunpack.c.l.b16 %v2086
      %v2137 = vunpack.c.l.b16 %v2096
      %v2138 = vpack.c.b16 %v2107, %v2106
      %v2139 = vpack.c.b16 %v2109, %v2108
      %v2140 = vpack.c.b16 %v2111, %v2110
      %v2141 = vpack.c.b16 %v2113, %v2112
      %v2142 = vpack.c.b16 %v2115, %v2114
      %v2143 = vpack.c.b16 %v2117, %v2116
      %v2144 = vpack.c.b16 %v2119, %v2118
      %v2145 = vpack.c.b16 %v2121, %v2120
      %v2146 = vpack.c.b16 %v2123, %v2122
      %v2147 = vpack.c.b16 %v2125, %v2124
      %v2148 = vpack.c.b16 %v2127, %v2126
      %v2149 = vpack.c.b16 %v2129, %v2128
      %v2150 = vpack.c.b16 %v2131, %v2130
      %v2151 = vpack.c.b16 %v2133, %v2132
      %v2152 = vpack.c.b16 %v2135, %v2134
      %v2153 = vpack.c.b16 %v2137, %v2136
      %v2162 = vunpack.c.l.b16 %v2098
      %v2163 = vunpack.c.l.b16 %v2099
      %v2164 = vunpack.c.l.b16 %v2100
      %v2165 = vunpack.c.l.b16 %v2101
      %v2166 = vunpack.c.l.b16 %v2102
      %v2167 = vunpack.c.l.b16 %v2103
      %v2168 = vunpack.c.l.b16 %v2104
      %v2169 = vunpack.c.l.b16 %v2105
      %v2170 = vpack.c.b16 %v2163, %v2162
      %v2171 = vpack.c.b16 %v2165, %v2164
      %v2172 = vpack.c.b16 %v2167, %v2166
      %v2173 = vpack.c.b16 %v2169, %v2168
      %v2179 = vsel %vm752, %v2138, 0
      %v2182 = vsel %vm752, %v2139, 0
      %v2185 = vsel %vm752, %v2140, 0
      %v2188 = vsel %vm752, %v2141, 0
      %v2191 = vsel %vm752, %v2142, 0
      %v2194 = vsel %vm752, %v2143, 0
      %v2197 = vsel %vm752, %v2144, 0
      %v2200 = vsel %vm752, %v2145, 0
      %v2203 = vsel %vm752, %v2146, 0
      %v2206 = vsel %vm752, %v2147, 0
      %v2209 = vsel %vm752, %v2148, 0
      %v2212 = vsel %vm752, %v2149, 0
      %v2215 = vsel %vm752, %v2150, 0
      %v2218 = vsel %vm752, %v2151, 0
      %v2221 = vsel %vm752, %v2152, 0
      %v2224 = vsel %vm752, %v2153, 0
      %2226 = vmatprep.subr.bf16.mxu0 0
      %2227 = vmatpush1.bf16.msra.mxu0 0
      %2228 = vmatprep.subr.bf16.mxu0 0
      %2229 = vmatpush1.bf16.msra.mxu0 0
      %2230 = vmatprep.subr.bf16.mxu0 0
      %2231 = vmatpush1.bf16.msra.mxu0 0
      %2232 = vmatprep.subr.bf16.mxu0 0
      %2233 = vmatpush1.bf16.msra.mxu0 0
      %2234 = vmatprep.subr.bf16.mxu0 0
      %2235 = vmatpush1.bf16.msra.mxu0 %v2173
      %2236 = vmatprep.subr.bf16.mxu0 0
      %2237 = vmatpush1.bf16.msra.mxu0 %v2172
      %2238 = vmatprep.subr.bf16.mxu0 0
      %2239 = vmatpush1.bf16.msra.mxu0 %v2171
      %2240 = vmatprep.subr.bf16.mxu0 0
      %2241 = vmatpush1.bf16.msra.mxu0 %v2170
      %2242 = vmatprep.subr.bf16.mxu0 0
      %2243 = vmatpush2.bf16.msra.mxu0 0
      %2244 = vmatprep.subr.bf16.mxu0 0
      %2245 = vmatpush2.bf16.msra.mxu0 0
      %2246 = vmatprep.subr.bf16.mxu0 0
      %2247 = vmatpush2.bf16.msra.mxu0 0
      %2248 = vmatprep.subr.bf16.mxu0 0
      %2249 = vmatpush2.bf16.msra.mxu0 0
      %2250 = vmatprep.subr.bf16.mxu0 0
      %2251 = vmatpush2.bf16.msra.mxu0 0
      %2252 = vmatprep.subr.bf16.mxu0 0
      %2253 = vmatpush2.bf16.msra.mxu0 0
      %2254 = vmatprep.subr.bf16.mxu0 0
      %2255 = vmatpush2.bf16.msra.mxu0 0
      %2256 = vmatprep.subr.bf16.mxu0 0
      %2257 = vmatpush2.bf16.msra.mxu0 0
      %2258 = vmatprep.mubr.bf16.mxu0 0
      %2259 = vmatmul.mubr.bf16.gmra.mxu0 %v2179
      %v2260 = vpop.f32.mrf.mxu0
      %v2261 = vadd.f32 0.0, %v2260
      %v2262 = vpop.f32.mrf.mxu0
      %v2263 = vpop.f32.mrf.mxu0
      %v2264 = vadd.f32 0.0, %v2263
      %v2265 = vpop.f32.mrf.mxu0
      %2266 = vmatprep.mubr.bf16.mxu0 0
      %2267 = vmatmul.mubr.bf16.gmra.mxu0 %v2182
      %v2268 = vpop.f32.mrf.mxu0
      %v2269 = vadd.f32 0.0, %v2268
      %v2270 = vpop.f32.mrf.mxu0
      %v2271 = vpop.f32.mrf.mxu0
      %v2272 = vadd.f32 0.0, %v2271
      %v2273 = vpop.f32.mrf.mxu0
      %2274 = vmatprep.mubr.bf16.mxu0 0
      %2275 = vmatmul.mubr.bf16.gmra.mxu0 %v2185
      %v2276 = vpop.f32.mrf.mxu0
      %v2277 = vadd.f32 0.0, %v2276
      %v2278 = vpop.f32.mrf.mxu0
      %v2279 = vpop.f32.mrf.mxu0
      %v2280 = vadd.f32 0.0, %v2279
      %v2281 = vpop.f32.mrf.mxu0
      %2282 = vmatprep.mubr.bf16.mxu0 0
      %2283 = vmatmul.mubr.bf16.gmra.mxu0 %v2188
      %v2284 = vpop.f32.mrf.mxu0
      %v2285 = vadd.f32 0.0, %v2284
      %v2286 = vpop.f32.mrf.mxu0
      %v2287 = vpop.f32.mrf.mxu0
      %v2288 = vadd.f32 0.0, %v2287
      %v2289 = vpop.f32.mrf.mxu0
      %2290 = vmatprep.mubr.bf16.mxu0 0
      %2291 = vmatmul.mubr.bf16.gmra.mxu0 %v2191
      %v2292 = vpop.f32.mrf.mxu0
      %v2293 = vadd.f32 0.0, %v2292
      %v2294 = vpop.f32.mrf.mxu0
      %v2295 = vpop.f32.mrf.mxu0
      %v2296 = vadd.f32 0.0, %v2295
      %v2297 = vpop.f32.mrf.mxu0
      %2298 = vmatprep.mubr.bf16.mxu0 0
      %2299 = vmatmul.mubr.bf16.gmra.mxu0 %v2194
      %v2300 = vpop.f32.mrf.mxu0
      %v2301 = vadd.f32 0.0, %v2300
      %v2302 = vpop.f32.mrf.mxu0
      %v2303 = vpop.f32.mrf.mxu0
      %v2304 = vadd.f32 0.0, %v2303
      %v2305 = vpop.f32.mrf.mxu0
      %2306 = vmatprep.mubr.bf16.mxu0 0
      %2307 = vmatmul.mubr.bf16.gmra.mxu0 %v2197
      %v2308 = vpop.f32.mrf.mxu0
      %v2309 = vadd.f32 0.0, %v2308
      %v2310 = vpop.f32.mrf.mxu0
      %v2311 = vpop.f32.mrf.mxu0
      %v2312 = vadd.f32 0.0, %v2311
      %v2313 = vpop.f32.mrf.mxu0
      %2314 = vmatprep.mubr.bf16.mxu0 0
      %2315 = vmatmul.mubr.bf16.gmra.mxu0 %v2200
      %v2316 = vpop.f32.mrf.mxu0
      %v2317 = vadd.f32 0.0, %v2316
      %v2318 = vpop.f32.mrf.mxu0
      %v2319 = vpop.f32.mrf.mxu0
      %v2320 = vadd.f32 0.0, %v2319
      %v2321 = vpop.f32.mrf.mxu0
      %2322 = vmatprep.mubr.bf16.mxu0 0
      %2323 = vmatmul.mubr.bf16.gmra.mxu0 %v2203
      %v2324 = vpop.f32.mrf.mxu0
      %v2325 = vadd.f32 0.0, %v2324
      %v2326 = vpop.f32.mrf.mxu0
      %v2327 = vpop.f32.mrf.mxu0
      %v2328 = vadd.f32 0.0, %v2327
      %v2329 = vpop.f32.mrf.mxu0
      %2330 = vmatprep.mubr.bf16.mxu0 0
      %2331 = vmatmul.mubr.bf16.gmra.mxu0 %v2206
      %v2332 = vpop.f32.mrf.mxu0
      %v2333 = vadd.f32 0.0, %v2332
      %v2334 = vpop.f32.mrf.mxu0
      %v2335 = vpop.f32.mrf.mxu0
      %v2336 = vadd.f32 0.0, %v2335
      %v2337 = vpop.f32.mrf.mxu0
      %2338 = vmatprep.mubr.bf16.mxu0 0
      %2339 = vmatmul.mubr.bf16.gmra.mxu0 %v2209
      %v2340 = vpop.f32.mrf.mxu0
      %v2341 = vadd.f32 0.0, %v2340
      %v2342 = vpop.f32.mrf.mxu0
      %v2343 = vpop.f32.mrf.mxu0
      %v2344 = vadd.f32 0.0, %v2343
      %v2345 = vpop.f32.mrf.mxu0
      %2346 = vmatprep.mubr.bf16.mxu0 0
      %2347 = vmatmul.mubr.bf16.gmra.mxu0 %v2212
      %v2348 = vpop.f32.mrf.mxu0
      %v2349 = vadd.f32 0.0, %v2348
      %v2350 = vpop.f32.mrf.mxu0
      %v2351 = vpop.f32.mrf.mxu0
      %v2352 = vadd.f32 0.0, %v2351
      %v2353 = vpop.f32.mrf.mxu0
      %2354 = vmatprep.mubr.bf16.mxu0 0
      %2355 = vmatmul.mubr.bf16.gmra.mxu0 %v2215
      %v2356 = vpop.f32.mrf.mxu0
      %v2357 = vadd.f32 0.0, %v2356
      %v2358 = vpop.f32.mrf.mxu0
      %v2359 = vpop.f32.mrf.mxu0
      %v2360 = vadd.f32 0.0, %v2359
      %v2361 = vpop.f32.mrf.mxu0
      %2362 = vmatprep.mubr.bf16.mxu0 0
      %2363 = vmatmul.mubr.bf16.gmra.mxu0 %v2218
      %v2364 = vpop.f32.mrf.mxu0
      %v2365 = vadd.f32 0.0, %v2364
      %v2366 = vpop.f32.mrf.mxu0
      %v2367 = vpop.f32.mrf.mxu0
      %v2368 = vadd.f32 0.0, %v2367
      %v2369 = vpop.f32.mrf.mxu0
      %2370 = vmatprep.mubr.bf16.mxu0 0
      %2371 = vmatmul.mubr.bf16.gmra.mxu0 %v2221
      %v2372 = vpop.f32.mrf.mxu0
      %v2373 = vadd.f32 0.0, %v2372
      %v2374 = vpop.f32.mrf.mxu0
      %v2375 = vpop.f32.mrf.mxu0
      %v2376 = vadd.f32 0.0, %v2375
      %v2377 = vpop.f32.mrf.mxu0
      %2378 = vmatprep.mubr.bf16.mxu0 0
      %2379 = vmatmul.mubr.bf16.gmra.mxu0 %v2224
      %v2380 = vpop.f32.mrf.mxu0
      %v2381 = vadd.f32 0.0, %v2380
      %v2382 = vpop.f32.mrf.mxu0
      %v2383 = vpop.f32.mrf.mxu0
      %v2384 = vadd.f32 0.0, %v2383
      %v2385 = vpop.f32.mrf.mxu0
      %2386 = vdwg.mxu0
      %v2387 = vadd.f32 %v1633, %v2261
      %v2388 = vadd.f32 %v1634, %v2264
      %v2389 = vadd.f32 %v1635, %v2269
      %v2390 = vadd.f32 %v1636, %v2272
      %v2391 = vadd.f32 %v1637, %v2277
      %v2392 = vadd.f32 %v1638, %v2280
      %v2393 = vadd.f32 %v1639, %v2285
      %v2394 = vadd.f32 %v1640, %v2288
      %v2395 = vadd.f32 %v1641, %v2293
      %v2396 = vadd.f32 %v1642, %v2296
      %v2397 = vadd.f32 %v1643, %v2301
      %v2398 = vadd.f32 %v1644, %v2304
      %v2399 = vadd.f32 %v1645, %v2309
      %v2400 = vadd.f32 %v1646, %v2312
      %v2401 = vadd.f32 %v1647, %v2317
      %v2402 = vadd.f32 %v1648, %v2320
      %v2403 = vadd.f32 %v1649, %v2325
      %v2404 = vadd.f32 %v1650, %v2328
      %v2405 = vadd.f32 %v1651, %v2333
      %v2406 = vadd.f32 %v1652, %v2336
      %v2407 = vadd.f32 %v1653, %v2341
      %v2408 = vadd.f32 %v1654, %v2344
      %v2409 = vadd.f32 %v1655, %v2349
      %v2410 = vadd.f32 %v1656, %v2352
      %v2411 = vadd.f32 %v1657, %v2357
      %v2412 = vadd.f32 %v1658, %v2360
      %v2413 = vadd.f32 %v1659, %v2365
      %v2414 = vadd.f32 %v1660, %v2368
      %v2415 = vadd.f32 %v1661, %v2373
      %v2416 = vadd.f32 %v1662, %v2376
      %v2417 = vadd.f32 %v1663, %v2381
      %v2418 = vadd.f32 %v1664, %v2384
      %v2419 = vld [vmem:[%s2] sm:$0x1]
      %v2421 = vlaneseq
      %v2422 = vshrl.u32 %v2421, 7
      %v2423 = vsub.s32 0, %v2422
      %v2424 = vrot.slane %v2419, %v2423
      %v2426 = vmul.f32 %v2387, %v2424
      %v2427 = vmul.f32 %v2388, %v2424
      %v2428 = vmul.f32 %v2389, %v2424
      %v2429 = vmul.f32 %v2390, %v2424
      %v2430 = vmul.f32 %v2391, %v2424
      %v2431 = vmul.f32 %v2392, %v2424
      %v2432 = vmul.f32 %v2393, %v2424
      %v2433 = vmul.f32 %v2394, %v2424
      %v2434 = vmul.f32 %v2395, %v2424
      %v2435 = vmul.f32 %v2396, %v2424
      %v2436 = vmul.f32 %v2397, %v2424
      %v2437 = vmul.f32 %v2398, %v2424
      %v2438 = vmul.f32 %v2399, %v2424
      %v2439 = vmul.f32 %v2400, %v2424
      %v2440 = vmul.f32 %v2401, %v2424
      %v2441 = vmul.f32 %v2402, %v2424
      %v2442 = vmul.f32 %v2403, %v2424
      %v2443 = vmul.f32 %v2404, %v2424
      %v2444 = vmul.f32 %v2405, %v2424
      %v2445 = vmul.f32 %v2406, %v2424
      %v2446 = vmul.f32 %v2407, %v2424
      %v2447 = vmul.f32 %v2408, %v2424
      %v2448 = vmul.f32 %v2409, %v2424
      %v2449 = vmul.f32 %v2410, %v2424
      %v2450 = vmul.f32 %v2411, %v2424
      %v2451 = vmul.f32 %v2412, %v2424
      %v2452 = vmul.f32 %v2413, %v2424
      %v2453 = vmul.f32 %v2414, %v2424
      %v2454 = vmul.f32 %v2415, %v2424
      %v2455 = vmul.f32 %v2416, %v2424
      %v2456 = vmul.f32 %v2417, %v2424
      %v2457 = vmul.f32 %v2418, %v2424
      %v2458 = vld [vmem:[%s3] sm:$0x1]
      %v2460 = vlaneseq
      %v2461 = vshrl.u32 %v2460, 7
      %v2462 = vsub.s32 0, %v2461
      %v2463 = vrot.slane %v2458, %v2462
      %v2465 = vadd.f32 %v2426, %v2463
      %v2466 = vadd.f32 %v2427, %v2463
      %v2467 = vadd.f32 %v2428, %v2463
      %v2468 = vadd.f32 %v2429, %v2463
      %v2469 = vadd.f32 %v2430, %v2463
      %v2470 = vadd.f32 %v2431, %v2463
      %v2471 = vadd.f32 %v2432, %v2463
      %v2472 = vadd.f32 %v2433, %v2463
      %v2473 = vadd.f32 %v2434, %v2463
      %v2474 = vadd.f32 %v2435, %v2463
      %v2475 = vadd.f32 %v2436, %v2463
      %v2476 = vadd.f32 %v2437, %v2463
      %v2477 = vadd.f32 %v2438, %v2463
      %v2478 = vadd.f32 %v2439, %v2463
      %v2479 = vadd.f32 %v2440, %v2463
      %v2480 = vadd.f32 %v2441, %v2463
      %v2481 = vadd.f32 %v2442, %v2463
      %v2482 = vadd.f32 %v2443, %v2463
      %v2483 = vadd.f32 %v2444, %v2463
      %v2484 = vadd.f32 %v2445, %v2463
      %v2485 = vadd.f32 %v2446, %v2463
      %v2486 = vadd.f32 %v2447, %v2463
      %v2487 = vadd.f32 %v2448, %v2463
      %v2488 = vadd.f32 %v2449, %v2463
      %v2489 = vadd.f32 %v2450, %v2463
      %v2490 = vadd.f32 %v2451, %v2463
      %v2491 = vadd.f32 %v2452, %v2463
      %v2492 = vadd.f32 %v2453, %v2463
      %v2493 = vadd.f32 %v2454, %v2463
      %v2494 = vadd.f32 %v2455, %v2463
      %v2495 = vadd.f32 %v2456, %v2463
      %v2496 = vadd.f32 %v2457, %v2463
      %v2497 = vmul.f32 %v2465, 0.1
      %v2498 = vmul.f32 %v2466, 0.1
      %v2499 = vmul.f32 %v2467, 0.1
      %v2500 = vmul.f32 %v2468, 0.1
      %v2501 = vmul.f32 %v2469, 0.1
      %v2502 = vmul.f32 %v2470, 0.1
      %v2503 = vmul.f32 %v2471, 0.1
      %v2504 = vmul.f32 %v2472, 0.1
      %v2505 = vmul.f32 %v2473, 0.1
      %v2506 = vmul.f32 %v2474, 0.1
      %v2507 = vmul.f32 %v2475, 0.1
      %v2508 = vmul.f32 %v2476, 0.1
      %v2509 = vmul.f32 %v2477, 0.1
      %v2510 = vmul.f32 %v2478, 0.1
      %v2511 = vmul.f32 %v2479, 0.1
      %v2512 = vmul.f32 %v2480, 0.1
      %v2513 = vmul.f32 %v2481, 0.1
      %v2514 = vmul.f32 %v2482, 0.1
      %v2515 = vmul.f32 %v2483, 0.1
      %v2516 = vmul.f32 %v2484, 0.1
      %v2517 = vmul.f32 %v2485, 0.1
      %v2518 = vmul.f32 %v2486, 0.1
      %v2519 = vmul.f32 %v2487, 0.1
      %v2520 = vmul.f32 %v2488, 0.1
      %v2521 = vmul.f32 %v2489, 0.1
      %v2522 = vmul.f32 %v2490, 0.1
      %v2523 = vmul.f32 %v2491, 0.1
      %v2524 = vmul.f32 %v2492, 0.1
      %v2525 = vmul.f32 %v2493, 0.1
      %v2526 = vmul.f32 %v2494, 0.1
      %v2527 = vmul.f32 %v2495, 0.1
      %v2528 = vmul.f32 %v2496, 0.1
      %v2529 = vmax.f32 %v2465, %v2497
      %v2530 = vmax.f32 %v2466, %v2498
      %v2531 = vmax.f32 %v2467, %v2499
      %v2532 = vmax.f32 %v2468, %v2500
      %v2533 = vmax.f32 %v2469, %v2501
      %v2534 = vmax.f32 %v2470, %v2502
      %v2535 = vmax.f32 %v2471, %v2503
      %v2536 = vmax.f32 %v2472, %v2504
      %v2537 = vmax.f32 %v2473, %v2505
      %v2538 = vmax.f32 %v2474, %v2506
      %v2539 = vmax.f32 %v2475, %v2507
      %v2540 = vmax.f32 %v2476, %v2508
      %v2541 = vmax.f32 %v2477, %v2509
      %v2542 = vmax.f32 %v2478, %v2510
      %v2543 = vmax.f32 %v2479, %v2511
      %v2544 = vmax.f32 %v2480, %v2512
      %v2545 = vmax.f32 %v2481, %v2513
      %v2546 = vmax.f32 %v2482, %v2514
      %v2547 = vmax.f32 %v2483, %v2515
      %v2548 = vmax.f32 %v2484, %v2516
      %v2549 = vmax.f32 %v2485, %v2517
      %v2550 = vmax.f32 %v2486, %v2518
      %v2551 = vmax.f32 %v2487, %v2519
      %v2552 = vmax.f32 %v2488, %v2520
      %v2553 = vmax.f32 %v2489, %v2521
      %v2554 = vmax.f32 %v2490, %v2522
      %v2555 = vmax.f32 %v2491, %v2523
      %v2556 = vmax.f32 %v2492, %v2524
      %v2557 = vmax.f32 %v2493, %v2525
      %v2558 = vmax.f32 %v2494, %v2526
      %v2559 = vmax.f32 %v2495, %v2527
      %v2560 = vmax.f32 %v2496, %v2528
      %v2561 = vpack.c.bf16 %v2530, %v2529
      %v2562 = vpack.c.bf16 %v2532, %v2531
      %v2563 = vpack.c.bf16 %v2534, %v2533
      %v2564 = vpack.c.bf16 %v2536, %v2535
      %v2565 = vpack.c.bf16 %v2538, %v2537
      %v2566 = vpack.c.bf16 %v2540, %v2539
      %v2567 = vpack.c.bf16 %v2542, %v2541
      %v2568 = vpack.c.bf16 %v2544, %v2543
      %v2569 = vpack.c.bf16 %v2546, %v2545
      %v2570 = vpack.c.bf16 %v2548, %v2547
      %v2571 = vpack.c.bf16 %v2550, %v2549
      %v2572 = vpack.c.bf16 %v2552, %v2551
      %v2573 = vpack.c.bf16 %v2554, %v2553
      %v2574 = vpack.c.bf16 %v2556, %v2555
      %v2575 = vpack.c.bf16 %v2558, %v2557
      %v2576 = vpack.c.bf16 %v2560, %v2559
      %v2593 = vunpack.c.l.b16 %v2561
      %v2594 = vunpack.c.h.b16 %v2561
      %v2595 = vunpack.c.l.b16 %v2562
      %v2596 = vunpack.c.h.b16 %v2562
      %v2597 = vunpack.c.l.b16 %v2563
      %v2598 = vunpack.c.h.b16 %v2563
      %v2599 = vunpack.c.l.b16 %v2564
      %v2600 = vunpack.c.h.b16 %v2564
      %v2601 = vunpack.c.l.b16 %v2565
      %v2602 = vunpack.c.h.b16 %v2565
      %v2603 = vunpack.c.l.b16 %v2566
      %v2604 = vunpack.c.h.b16 %v2566
      %v2605 = vunpack.c.l.b16 %v2567
      %v2606 = vunpack.c.h.b16 %v2567
      %v2607 = vunpack.c.l.b16 %v2568
      %v2608 = vunpack.c.h.b16 %v2568
      %v2609 = vunpack.c.l.b16 %v2569
      %v2610 = vunpack.c.h.b16 %v2569
      %v2611 = vunpack.c.l.b16 %v2570
      %v2612 = vunpack.c.h.b16 %v2570
      %v2613 = vunpack.c.l.b16 %v2571
      %v2614 = vunpack.c.h.b16 %v2571
      %v2615 = vunpack.c.l.b16 %v2572
      %v2616 = vunpack.c.h.b16 %v2572
      %v2617 = vunpack.c.l.b16 %v2573
      %v2618 = vunpack.c.h.b16 %v2573
      %v2619 = vunpack.c.l.b16 %v2574
      %v2620 = vunpack.c.h.b16 %v2574
      %v2621 = vunpack.c.l.b16 %v2575
      %v2622 = vunpack.c.h.b16 %v2575
      %v2623 = vunpack.c.l.b16 %v2576
      %v2624 = vunpack.c.h.b16 %v2576
      %v2625 = vpack.c.b16 %v2593, %v2593
      %v2626 = vpack.c.b16 %v2594, %v2594
      %v2627 = vpack.c.b16 %v2595, %v2595
      %v2628 = vpack.c.b16 %v2596, %v2596
      %v2629 = vpack.c.b16 %v2597, %v2597
      %v2630 = vpack.c.b16 %v2598, %v2598
      %v2631 = vpack.c.b16 %v2599, %v2599
      %v2632 = vpack.c.b16 %v2600, %v2600
      %v2633 = vpack.c.b16 %v2601, %v2601
      %v2634 = vpack.c.b16 %v2602, %v2602
      %v2635 = vpack.c.b16 %v2603, %v2603
      %v2636 = vpack.c.b16 %v2604, %v2604
      %v2637 = vpack.c.b16 %v2605, %v2605
      %v2638 = vpack.c.b16 %v2606, %v2606
      %v2639 = vpack.c.b16 %v2607, %v2607
      %v2640 = vpack.c.b16 %v2608, %v2608
      %v2641 = vpack.c.b16 %v2609, %v2609
      %v2642 = vpack.c.b16 %v2610, %v2610
      %v2643 = vpack.c.b16 %v2611, %v2611
      %v2644 = vpack.c.b16 %v2612, %v2612
      %v2645 = vpack.c.b16 %v2613, %v2613
      %v2646 = vpack.c.b16 %v2614, %v2614
      %v2647 = vpack.c.b16 %v2615, %v2615
      %v2648 = vpack.c.b16 %v2616, %v2616
      %v2649 = vpack.c.b16 %v2617, %v2617
      %v2650 = vpack.c.b16 %v2618, %v2618
      %v2651 = vpack.c.b16 %v2619, %v2619
      %v2652 = vpack.c.b16 %v2620, %v2620
      %v2653 = vpack.c.b16 %v2621, %v2621
      %v2654 = vpack.c.b16 %v2622, %v2622
      %v2655 = vpack.c.b16 %v2623, %v2623
      %v2656 = vpack.c.b16 %v2624, %v2624
      %2689 = vst [vmem:[%s221] sm:$0xf] %v2625
      %2690 = vst [vmem:[%s221 + $0x4] sm:$0xf] %v2626
      %2691 = vst [vmem:[%s221 + $0x8] sm:$0xf] %v2627
      %2692 = vst [vmem:[%s221 + $0xc] sm:$0xf] %v2628
      %2693 = vst [vmem:[%s221 + $0x10] sm:$0xf] %v2629
      %2694 = vst [vmem:[%s221 + $0x14] sm:$0xf] %v2630
      %2695 = vst [vmem:[%s221 + $0x18] sm:$0xf] %v2631
      %2696 = vst [vmem:[%s221 + $0x1c] sm:$0xf] %v2632
      %2697 = vst [vmem:[%s221 + $0x20] sm:$0xf] %v2633
      %2698 = vst [vmem:[%s221 + $0x24] sm:$0xf] %v2634
      %2699 = vst [vmem:[%s221 + $0x28] sm:$0xf] %v2635
      %2700 = vst [vmem:[%s221 + $0x2c] sm:$0xf] %v2636
      %2701 = vst [vmem:[%s221 + $0x30] sm:$0xf] %v2637
      %2702 = vst [vmem:[%s221 + $0x34] sm:$0xf] %v2638
      %2703 = vst [vmem:[%s221 + $0x38] sm:$0xf] %v2639
      %2704 = vst [vmem:[%s221 + $0x3c] sm:$0xf] %v2640
      %2705 = vst [vmem:[%s221 + $0x40] sm:$0xf] %v2641
      %2706 = vst [vmem:[%s221 + $0x44] sm:$0xf] %v2642
      %2707 = vst [vmem:[%s221 + $0x48] sm:$0xf] %v2643
      %2708 = vst [vmem:[%s221 + $0x4c] sm:$0xf] %v2644
      %2709 = vst [vmem:[%s221 + $0x50] sm:$0xf] %v2645
      %2710 = vst [vmem:[%s221 + $0x54] sm:$0xf] %v2646
      %2711 = vst [vmem:[%s221 + $0x58] sm:$0xf] %v2647
      %2712 = vst [vmem:[%s221 + $0x5c] sm:$0xf] %v2648
      %2713 = vst [vmem:[%s221 + $0x60] sm:$0xf] %v2649
      %2714 = vst [vmem:[%s221 + $0x64] sm:$0xf] %v2650
      %2715 = vst [vmem:[%s221 + $0x68] sm:$0xf] %v2651
      %2716 = vst [vmem:[%s221 + $0x6c] sm:$0xf] %v2652
      %2717 = vst [vmem:[%s221 + $0x70] sm:$0xf] %v2653
      %2718 = vst [vmem:[%s221 + $0x74] sm:$0xf] %v2654
      %2719 = vst [vmem:[%s221 + $0x78] sm:$0xf] %v2655
      %2720 = vst [vmem:[%s221 + $0x7c] sm:$0xf] %v2656
      %s2721 = smul.u32 16, %s20
      %p2722 = scmp.lt.s32.totalorder %s19, 1
      %s2723 = scalar_select %p2722, %s19, 1
      %p2724 = scmp.lt.s32.totalorder %s2721, 15
      %s2725 = scalar_select %p2724, %s2721, 15
      %s2726 = smul.addr %s2725, 2
      %s2727 = smul.addr %s2723, 32
      %s2728 = sadd.s32 %s2726, %s2727
      %s2729 = smul.addr %s2728, 4
      %s2730 = scalar_lea.vmem %s4, %s2729
      // Predicated region
      $region37: #{_lambda_.1} parent=35 // pred_check
        %p2731 = pneg %p136
      $region38: #{_lambda_.1} parent=35 // pred_check_branch
        %2733 = sbr.rel (%p2731) target = $region40
      $region39: #{_lambda_.1} parent=35 // pred_region
        %s2734 = smul.u32 16, %s20
      $region40: #{_lambda_.1} parent=35 // pred_fallthru
        _
    $region36: #{_lambda_.1} parent=5 // pred_fallthru
      _
    %p2735 = scmp.le.s32.totalorder 2, %s10
    // Predicated region
    $region41: #{_lambda_.1} parent=5 // pred_check
      %p2736 = pneg %p2735
    $region42: #{_lambda_.1} parent=5 // pred_check_branch
      %2738 = sbr.rel (%p2736) target = $region44
    $region43: #{_lambda_.1} parent=5 // pred_region
      %s2739 = ssub.s32 %s10, 2
      // Predicated region
      $region45: #{_lambda_.1} parent=43 // pred_check
        %p2740 = pneg %p142
      $region46: #{_lambda_.1} parent=43 // pred_check_branch
        %2742 = sbr.rel (%p2740) target = $region48
      $region47: #{_lambda_.1} parent=43 // pred_region
        %s2743 = smul.u32 16, %s22
        %p2744 = scmp.lt.s32.totalorder %s21, 1
        %s2745 = scalar_select %p2744, %s21, 1
        %p2746 = scmp.lt.s32.totalorder %s2743, 15
        %s2747 = scalar_select %p2746, %s2743, 15
        %s2748 = smul.addr %s2747, 2
        %s2749 = smul.addr %s2745, 32
        %s2750 = sadd.s32 %s2748, %s2749
        %s2751 = smul.addr %s2750, 4
        %s2752 = scalar_lea.vmem %s4, %s2751
      $region48: #{_lambda_.1} parent=43 // pred_fallthru
        _
    $region44: #{_lambda_.1} parent=5 // pred_fallthru
      _
  $region6: #{_lambda_.1} parent=0 // loop_footer
    %s14 = sadd.s32 1, %s10
  $region7: #{_lambda_.1} parent=0 // loop_footer_branch
    %9 = sbr.rel target = $region3
  $region8: #{_lambda_.1} parent=0 // loop_exit
    _

</llo_original>
